<compile_context>
chip_gen: v5e
topology: v5e:2x2
jax: 0.10.0
libtpu: 0.0.40
codegen_flags: <defaults>
</compile_context>

<pallas_src>
import functools

import jax
import jax.numpy as jnp
import numpy as np
from jax.experimental import pallas as pl
from jax.experimental.pallas import tpu as pltpu


def slot_classifier_kernel(
    x_ref, intent_ref, mask_ref,
    w_slot_ref, w_ic_ref, w_ao_mix_ref, w_ao_q_ref,
    w_ih_f_ref, w_ih_r_ref, b_gate_f_ref, b_gate_r_ref,
    w_hh_f_ref, w_hh_r_ref,
    w_lin_f_ref, w_lin_b_ref, b_lin_ref,
    out_ref,
    gxf_ref, gxr_ref, hf_ref, hb_ref,
    *, batch_tile,
):
    R, E = hf_ref.shape            # R = TB * S rows, time-major within the batch tile
    TB = batch_tile
    S = R // TB
    E3 = 3 * E
    NEG = jnp.float32(-1e30)       # finite "-inf": avoids NaN from fully-masked columns
    bf16 = jnp.bfloat16
    f32 = jnp.float32

    # --- linear_slot (no bias): bf16 MXU operands, f32 accumulate ---
    xq = jnp.dot(x_ref[...], w_slot_ref[...], preferred_element_type=f32)        # (R, E)

    # --- intent context (tiled time-major per row by the wrapper):
    #     softmax in f32, projection on the MXU in bf16 ---
    ic = jax.nn.softmax(intent_ref[...], axis=-1)                                 # (R, NI)
    ctx_rows = jnp.dot(ic.astype(bf16), w_ic_ref[...],
                       preferred_element_type=f32)                                # (R, E)
    ctx0 = ctx_rows[:TB, :]                                                       # (TB, E) = LSTM h0 = c0

    # --- Attention: dot score vs the single per-batch context vector, softmax over
    #     the sequence.  Rows are time-major (row = s*TB + b), so per-batch stats are
    #     column stats of an (R, TB) one-hot-selected view. ---
    rowscore = jnp.sum(xq * ctx_rows, axis=-1, keepdims=True)                     # (R, 1)
    valid = mask_ref[...] >= 0.5                                                  # (R, 1)
    logit = jnp.where(valid, rowscore, NEG)

    # row -> local-batch one-hot selector, built in-kernel (no HBM `sel` input).
    # b(r) = r - TB*floor((r+0.5)/TB); exact since the fp error << 0.5/TB.
    row_f = jax.lax.broadcasted_iota(jnp.int32, (R, TB), 0).astype(f32)
    col_f = jax.lax.broadcasted_iota(jnp.int32, (R, TB), 1).astype(f32)
    b_of_row = row_f - TB * jnp.floor((row_f + 0.5) * jnp.float32(1.0 / TB))
    sel = b_of_row == col_f                                                       # (R, TB) bool
    sel_f = sel.astype(f32)

    col_max = jnp.max(jnp.where(sel, logit, NEG), axis=0, keepdims=True)          # (1, TB)
    row_max = jnp.max(jnp.where(sel, col_max, NEG), axis=1, keepdims=True)        # (R, 1)
    p = jnp.where(valid, jnp.exp(logit - row_max), 0.0)                           # only R exps
    col_sum = jnp.sum(sel_f * p, axis=0, keepdims=True)                           # (1, TB)
    row_den = jnp.sum(sel_f * col_sum, axis=1, keepdims=True)                     # (R, 1)
    # NOTE: a fully-masked sequence yields a zero attention mix here (PyTorch: NaN).
    w_row = p * pl.reciprocal(jnp.maximum(row_den, 1e-30), approx=True)           # (R, 1)

    mix = w_row * ctx_rows                                                        # (R, E)
    att = jnp.tanh(
        jnp.dot(mix.astype(bf16), w_ao_mix_ref[...], preferred_element_type=f32)
        + jnp.dot(xq.astype(bf16), w_ao_q_ref[...], preferred_element_type=f32))  # (R, E)
    # dropout(rate=0.0) == identity

    # --- LSTM input->hidden gates, both directions, batched over all R rows ---
    att_b = att.astype(bf16)
    gxf_ref[...] = (jnp.dot(att_b, w_ih_f_ref[...], preferred_element_type=f32)
                    + b_gate_f_ref[...])
    gxr_ref[...] = (jnp.dot(att_b, w_ih_r_ref[...], preferred_element_type=f32)
                    + b_gate_r_ref[...])

    # hoist recurrent weights out of the serial loop (bf16 MXU operands)
    w_hh_f = w_hh_f_ref[...]
    w_hh_r = w_hh_r_ref[...]

    def cell(gates, c):
        # gate order [i, f, o, g]: one sigmoid over 3E lanes + one tanh over E lanes
        sg = jax.nn.sigmoid(gates[:, :E3])
        g = jnp.tanh(gates[:, E3:])
        i, f, o = sg[:, :E], sg[:, E:2 * E], sg[:, 2 * E:]
        c = f * c + i * g
        return o * jnp.tanh(c), c

    def step(k, carry):
        hf, cf, hr, cr = carry
        tf = pl.multiple_of(k * TB, TB)               # forward timestep rows
        tr = pl.multiple_of((S - 1 - k) * TB, TB)     # reverse timestep rows
        gf = gxf_ref[pl.ds(tf, TB), :] + jnp.dot(hf.astype(bf16), w_hh_f,
                                                 preferred_element_type=f32)
        gr = gxr_ref[pl.ds(tr, TB), :] + jnp.dot(hr.astype(bf16), w_hh_r,
                                                 preferred_element_type=f32)
        hf, cf = cell(gf, cf)
        hr, cr = cell(gr, cr)
        hf_ref[pl.ds(tf, TB), :] = hf
        hb_ref[pl.ds(tr, TB), :] = hr
        return hf, cf, hr, cr

    # fused fwd+rev recurrence; full unroll only for short sequences (vreg pressure).
    unroll = True if S <= 16 else 4
    jax.lax.fori_loop(0, S, step, (ctx0, ctx0, ctx0, ctx0), unroll=unroll)

    # --- final linear over [h_fwd, h_bwd]; NS padded to 128 lanes -> unmasked stores ---
    out_ref[...] = (
        jnp.dot(hf_ref[...].astype(bf16), w_lin_f_ref[...], preferred_element_type=f32)
        + jnp.dot(hb_ref[...].astype(bf16), w_lin_b_ref[...], preferred_element_type=f32)
        + b_lin_ref[...])


def _pick_batch_tile(B, S, target_rows=1024, min_tiles=2):
    """Pick the batch tile TB (grid = B // TB).

    TB < B must be a multiple of 16 (keeps R = TB*S legal for bf16/f32 blocks).
    Prefers >= min_tiles grid steps so both v7x TensorCores get work, then the
    largest tile under the row budget.
    """
    divs = [tb for tb in range(16, B, 16) if B % tb == 0]
    fits = [tb for tb in divs if tb * S <= target_rows]
    multi = [tb for tb in fits if B // tb >= min_tiles]
    if multi:
        return max(multi)
    if B * S <= target_rows:
        return B                       # whole batch in one grid step (NT=1)
    if fits:
        return max(fits)
    if divs:
        return min(divs)
    # TODO(synk): B has no multiple-of-16 divisor; NT=1 fallback (single core on v7x).
    return B


def _vmem_limit_bytes(R, D_in, NI, E, NSp):
    """Rough per-tile VMEM footprint (8,128)-padded, with headroom."""
    def t(r, c, b):
        return -(-r // 8) * 8 * (-(-c // 128) * 128) * b
    inputs = 2 * (t(R, D_in, 2) + t(R, NI, 4) + t(R, 1, 4))       # double-buffered
    output = 2 * t(R, NSp, 4)
    weights = 2 * (t(D_in, E, 2) + t(NI, E, 2) + 2 * t(E, E, 2)
                   + 4 * t(E, 4 * E, 2) + 2 * t(E, NSp, 2)
                   + 2 * t(1, 4 * E, 4) + t(1, NSp, 4))
    scratch = 2 * t(R, 4 * E, 4) + 2 * t(R, E, 4)
    est = inputs + output + weights + scratch
    return int(min(max(2 * est, 32 * 1024 * 1024), 96 * 1024 * 1024))


def slot_classifier_forward(x, intent_context, attention_mask, params, batch_tile=None):
    B, S, D_in = x.shape
    NI = intent_context.shape[-1]
    E = params["w_slot"].shape[0]          # torch layout: (E, D_in)
    NS = params["w_lin"].shape[0]          # torch layout: (NS, 2E)
    NSp = ((NS + 127) // 128) * 128        # lane-dense padded output width

    TB = batch_tile if batch_tile is not None else _pick_batch_tile(B, S)
    assert B % TB == 0
    NT = B // TB
    R = TB * S
    bf16, f32 = jnp.bfloat16, jnp.float32

    # ---- weight preprocessing (plain-JAX glue; MXU operands in bf16) ----
    def reorder_rows(w):                   # (4E, X): torch gate order [i,f,g,o] -> [i,f,o,g]
        i, f, g, o = jnp.split(w, 4, axis=0)
        return jnp.concatenate([i, f, o, g], axis=0)

    def reorder_bias(b):
        i, f, g, o = jnp.split(b, 4)
        return jnp.concatenate([i, f, o, g])

    w_slot_t = params["w_slot"].T.astype(bf16)                     # (D_in, E)
    w_ic_t = params["w_ic"].T.astype(bf16)                         # (NI, E)
    w_ao_t = params["w_attn_out"].T                                # (2E, E)
    w_ao_mix = w_ao_t[:E, :].astype(bf16)                          # mix part
    w_ao_q = w_ao_t[E:, :].astype(bf16)                            # query part

    w_ih_f_t = reorder_rows(params["w_ih_f"]).T.astype(bf16)       # (E, 4E)
    w_ih_r_t = reorder_rows(params["w_ih_r"]).T.astype(bf16)
    w_hh_f_t = reorder_rows(params["w_hh_f"]).T.astype(bf16)
    w_hh_r_t = reorder_rows(params["w_hh_r"]).T.astype(bf16)
    b_gate_f = reorder_bias(params["b_ih_f"] + params["b_hh_f"]).reshape(1, 4 * E).astype(f32)
    b_gate_r = reorder_bias(params["b_ih_r"] + params["b_hh_r"]).reshape(1, 4 * E).astype(f32)

    w_lin_t = params["w_lin"].T.astype(f32)                        # (2E, NS)
    w_lin_pad = jnp.zeros((2 * E, NSp), f32).at[:, :NS].set(w_lin_t)
    w_lin_f = w_lin_pad[:E, :].astype(bf16)                        # (E, NSp)
    w_lin_b = w_lin_pad[E:, :].astype(bf16)
    b_lin = jnp.zeros((1, NSp), f32).at[:, :NS].set(params["b_lin"].reshape(1, NS))

    # ---- activation layout: time-major within each batch tile (row = s*TB + b) ----
    x_r = (x.reshape(NT, TB, S, D_in).transpose(0, 2, 1, 3)
            .reshape(NT * R, D_in).astype(bf16))
    intent_r = (jnp.broadcast_to(intent_context.reshape(NT, 1, TB, NI), (NT, S, TB, NI))
                .reshape(NT * R, NI).astype(f32))
    mask_r = (attention_mask.astype(f32)
              .reshape(NT, TB, S).transpose(0, 2, 1).reshape(NT * R, 1))

    def full_spec(shape):
        n = len(shape)
        return pl.BlockSpec(shape, lambda b, _n=n: (0,) * _n)

    grid_spec = pltpu.PrefetchScalarGridSpec(
        num_scalar_prefetch=0,
        grid=(NT,),
        in_specs=[
            pl.BlockSpec((R, D_in), lambda b: (b, 0)),       # x rows for this batch tile
            pl.BlockSpec((R, NI), lambda b: (b, 0)),         # intent logits, tiled per row
            pl.BlockSpec((R, 1), lambda b: (b, 0)),          # attention mask per row
            full_spec((D_in, E)), full_spec((NI, E)),
            full_spec((E, E)), full_spec((E, E)),
            full_spec((E, 4 * E)), full_spec((E, 4 * E)),
            full_spec((1, 4 * E)), full_spec((1, 4 * E)),
            full_spec((E, 4 * E)), full_spec((E, 4 * E)),
            full_spec((E, NSp)), full_spec((E, NSp)), full_spec((1, NSp)),
        ],
        out_specs=pl.BlockSpec((R, NSp), lambda b: (b, 0)),
        scratch_shapes=[
            pltpu.VMEM((R, 4 * E), f32),      # fwd input->hidden gates (time-major)
            pltpu.VMEM((R, 4 * E), f32),      # rev input->hidden gates
            pltpu.VMEM((R, E), f32),          # h forward
            pltpu.VMEM((R, E), f32),          # h backward
        ],
    )

    out_flat = pl.pallas_call(
        functools.partial(slot_classifier_kernel, batch_tile=TB),
        out_shape=jax.ShapeDtypeStruct((NT * R, NSp), f32),
        grid_spec=grid_spec,
        compiler_params=pltpu.CompilerParams(
            dimension_semantics=("parallel",),
            vmem_limit_bytes=_vmem_limit_bytes(R, D_in, NI, E, NSp)),
    )(x_r, intent_r, mask_r,
      w_slot_t, w_ic_t, w_ao_mix, w_ao_q,
      w_ih_f_t, w_ih_r_t, b_gate_f, b_gate_r,
      w_hh_f_t, w_hh_r_t,
      w_lin_f, w_lin_b, b_lin)

    # drop NS padding, undo the time-major-within-tile layout (plumbing only)
    out = out_flat[:, :NS]
    return out.reshape(NT, S, TB, NS).transpose(0, 2, 1, 3).reshape(B, S, NS)


def reference_forward(x, intent_context, attention_mask, params):
    """Pure-JAX f32 reference mirroring the PyTorch forward (attn branch)."""
    xq = jnp.einsum('bsd,ed->bse', x, params["w_slot"])
    ic = jax.nn.softmax(intent_context, axis=-1)
    ctx = jnp.einsum('bn,en->be', ic, params["w_ic"])                 # (B, E)
    scores = jnp.einsum('bse,be->bs', xq, ctx)[..., None]             # (B, S, 1)
    scores = jnp.where(attention_mask[..., None] == 0, -jnp.inf, scores)
    weights = jax.nn.softmax(scores, axis=1)
    mix = weights * ctx[:, None, :]
    combined = jnp.concatenate([mix, xq], axis=-1)
    att = jnp.tanh(jnp.einsum('bsf,ef->bse', combined, params["w_attn_out"]))

    def lstm_dir(inp, w_ih, w_hh, b_ih, b_hh, h0, c0, reverse):
        seq = inp[:, ::-1, :] if reverse else inp

        def step(carry, x_t):
            h, c = carry
            gates = x_t @ w_ih.T + b_ih + h @ w_hh.T + b_hh
            i, f, g, o = jnp.split(gates, 4, axis=-1)
            i, f, o = jax.nn.sigmoid(i), jax.nn.sigmoid(f), jax.nn.sigmoid(o)
            g = jnp.tanh(g)
            c = f * c + i * g
            h = o * jnp.tanh(c)
            return (h, c), h

        _, hs = jax.lax.scan(step, (h0, c0), jnp.swapaxes(seq, 0, 1))
        hs = jnp.swapaxes(hs, 0, 1)
        return hs[:, ::-1, :] if reverse else hs

    h_f = lstm_dir(att, params["w_ih_f"], params["w_hh_f"],
                   params["b_ih_f"], params["b_hh_f"], ctx, ctx, False)
    h_b = lstm_dir(att, params["w_ih_r"], params["w_hh_r"],
                   params["b_ih_r"], params["b_hh_r"], ctx, ctx, True)
    return jnp.concatenate([h_f, h_b], axis=-1) @ params["w_lin"].T + params["b_lin"]


if __name__ == "__main__":
    # small shapes: batch=2, seq(max_seq_len)=8, input_dim=32,
    # attention_embedding_size=32, num_intent_labels=4, num_slot_labels=8
    B, S, D_in, E, NI, NS = 2, 8, 32, 32, 4, 8

    key = jax.random.PRNGKey(0)
    keys = jax.random.split(key, 12)

    def rnd(k, shape, scale=0.1):
        return scale * jax.random.normal(k, shape, dtype=jnp.float32)

    params = dict(
        w_slot=rnd(keys[0], (E, D_in)),            # linear_slot (no bias)
        w_ic=rnd(keys[1], (E, NI)),                # linear_intent_context (no bias)
        w_attn_out=rnd(keys[2], (E, 2 * E)),       # Attention.linear_out (no bias)
        w_ih_f=rnd(keys[3], (4 * E, E)),           # LSTM forward
        w_hh_f=rnd(keys[4], (4 * E, E)),
        b_ih_f=jnp.zeros((4 * E,), jnp.float32),   # init_weights: LSTM biases = 0
        b_hh_f=jnp.zeros((4 * E,), jnp.float32),
        w_ih_r=rnd(keys[5], (4 * E, E)),           # LSTM reverse
        w_hh_r=rnd(keys[6], (4 * E, E)),
        b_ih_r=jnp.zeros((4 * E,), jnp.float32),
        b_hh_r=jnp.zeros((4 * E,), jnp.float32),
        w_lin=rnd(keys[7], (NS, 2 * E)),           # final linear (with bias)
        b_lin=rnd(keys[8], (NS,), 0.01),
    )

    x = jax.random.normal(keys[9], (B, S, D_in), dtype=jnp.float32)
    intent = jax.random.normal(keys[10], (B, NI), dtype=jnp.float32)
    mask = jnp.ones((B, S), jnp.float32).at[1, 5:].set(0.0)   # pad last 3 tokens of batch 1

    out = slot_classifier_forward(x, intent, mask, params)
    out = jax.block_until_ready(out)

    ref = reference_forward(x, intent, mask, params)
    np.testing.assert_allclose(np.asarray(out), np.asarray(ref), atol=2e-2, rtol=2e-2)

    print("KERNEL_OK")
</pallas_src>

<mosaic_0001>
module attributes {stable_mosaic.version = 11 : i64} {
  func.func @slot_classifier_kernel(%arg0: i32, %arg1: memref<16x32xbf16, #tpu.memory_space<vmem>>, %arg2: memref<16x4xf32, #tpu.memory_space<vmem>>, %arg3: memref<16x1xf32, #tpu.memory_space<vmem>>, %arg4: memref<32x32xbf16, #tpu.memory_space<vmem>>, %arg5: memref<4x32xbf16, #tpu.memory_space<vmem>>, %arg6: memref<32x32xbf16, #tpu.memory_space<vmem>>, %arg7: memref<32x32xbf16, #tpu.memory_space<vmem>>, %arg8: memref<32x128xbf16, #tpu.memory_space<vmem>>, %arg9: memref<32x128xbf16, #tpu.memory_space<vmem>>, %arg10: memref<1x128xf32, #tpu.memory_space<vmem>>, %arg11: memref<1x128xf32, #tpu.memory_space<vmem>>, %arg12: memref<32x128xbf16, #tpu.memory_space<vmem>>, %arg13: memref<32x128xbf16, #tpu.memory_space<vmem>>, %arg14: memref<32x128xbf16, #tpu.memory_space<vmem>>, %arg15: memref<32x128xbf16, #tpu.memory_space<vmem>>, %arg16: memref<1x128xf32, #tpu.memory_space<vmem>>, %arg17: memref<16x128xf32, #tpu.memory_space<vmem>>, %arg18: memref<16x128xf32, #tpu.memory_space<vmem>>, %arg19: memref<16x128xf32, #tpu.memory_space<vmem>>, %arg20: memref<16x32xf32, #tpu.memory_space<vmem>>, %arg21: memref<16x32xf32, #tpu.memory_space<vmem>>) attributes {dimension_semantics = [#tpu.dimension_semantics<parallel>], iteration_bounds = array<i64: 1>, scalar_prefetch = 0 : i64, scratch_operands = 4 : i64, tpu.core_type = #tpu.core_type<tc>, window_params = [{transform_indices = @transform_0, window_bounds = array<i64: 16, 32>}, {transform_indices = @transform_1, window_bounds = array<i64: 16, 4>}, {transform_indices = @transform_2, window_bounds = array<i64: 16, 1>}, {pipeline_mode = #tpu.pipeline_mode<synchronous>, transform_indices = @transform_3, window_bounds = array<i64: 32, 32>}, {pipeline_mode = #tpu.pipeline_mode<synchronous>, transform_indices = @transform_4, window_bounds = array<i64: 4, 32>}, {pipeline_mode = #tpu.pipeline_mode<synchronous>, transform_indices = @transform_5, window_bounds = array<i64: 32, 32>}, {pipeline_mode = #tpu.pipeline_mode<synchronous>, transform_indices = @transform_6, window_bounds = array<i64: 32, 32>}, {pipeline_mode = #tpu.pipeline_mode<synchronous>, transform_indices = @transform_7, window_bounds = array<i64: 32, 128>}, {pipeline_mode = #tpu.pipeline_mode<synchronous>, transform_indices = @transform_8, window_bounds = array<i64: 32, 128>}, {pipeline_mode = #tpu.pipeline_mode<synchronous>, transform_indices = @transform_9, window_bounds = array<i64: 1, 128>}, {pipeline_mode = #tpu.pipeline_mode<synchronous>, transform_indices = @transform_10, window_bounds = array<i64: 1, 128>}, {pipeline_mode = #tpu.pipeline_mode<synchronous>, transform_indices = @transform_11, window_bounds = array<i64: 32, 128>}, {pipeline_mode = #tpu.pipeline_mode<synchronous>, transform_indices = @transform_12, window_bounds = array<i64: 32, 128>}, {pipeline_mode = #tpu.pipeline_mode<synchronous>, transform_indices = @transform_13, window_bounds = array<i64: 32, 128>}, {pipeline_mode = #tpu.pipeline_mode<synchronous>, transform_indices = @transform_14, window_bounds = array<i64: 32, 128>}, {pipeline_mode = #tpu.pipeline_mode<synchronous>, transform_indices = @transform_15, window_bounds = array<i64: 1, 128>}, {transform_indices = @transform_16, window_bounds = array<i64: 16, 128>}]} {
    %c0 = arith.constant 0 : index
    %c0_0 = arith.constant 0 : index
    %0 = vector.load %arg1[%c0, %c0_0] : memref<16x32xbf16, #tpu.memory_space<vmem>>, vector<16x32xbf16>
    %c0_1 = arith.constant 0 : index
    %c0_2 = arith.constant 0 : index
    %1 = vector.load %arg4[%c0_1, %c0_2] : memref<32x32xbf16, #tpu.memory_space<vmem>>, vector<32x32xbf16>
    %cst = arith.constant dense<0.000000e+00> : vector<16x32xf32>
    %2 = tpu.matmul %0, %1, %cst {dimension_numbers = #tpu.dot_dimension_numbers<[1], [0], [0], [1], [0, 0, 1, 1], [], []>} : vector<16x32xbf16>, vector<32x32xbf16>, vector<16x32xf32> -> vector<16x32xf32>
    %c0_3 = arith.constant 0 : index
    %c0_4 = arith.constant 0 : index
    %3 = vector.load %arg2[%c0_3, %c0_4] : memref<16x4xf32, #tpu.memory_space<vmem>>, vector<16x4xf32>
    %cst_5 = arith.constant dense<0xFF800000> : vector<16xf32>
    %4 = vector.multi_reduction <maximumf>, %3, %cst_5 [1] : vector<16x4xf32> to vector<16xf32>
    %cst_6 = arith.constant 0xFF800000 : f32
    %5 = vector.broadcast %cst_6 : f32 to vector<16xf32>
    %6 = arith.maximumf %5, %4 : vector<16xf32>
    %7 = vector.shape_cast %6 : vector<16xf32> to vector<16x1xf32>
    %8 = vector.broadcast %7 : vector<16x1xf32> to vector<16x4xf32>
    %9 = arith.subf %3, %8 : vector<16x4xf32>
    %10 = math.exp %9 : vector<16x4xf32>
    %cst_7 = arith.constant dense<0.000000e+00> : vector<16xf32>
    %11 = vector.multi_reduction <add>, %10, %cst_7 [1] : vector<16x4xf32> to vector<16xf32>
    %12 = vector.shape_cast %11 : vector<16xf32> to vector<16x1xf32>
    %13 = vector.broadcast %12 : vector<16x1xf32> to vector<16x4xf32>
    %14 = arith.divf %10, %13 : vector<16x4xf32>
    %15 = arith.truncf %14 : vector<16x4xf32> to vector<16x4xbf16>
    %c0_8 = arith.constant 0 : index
    %c0_9 = arith.constant 0 : index
    %16 = vector.load %arg5[%c0_8, %c0_9] : memref<4x32xbf16, #tpu.memory_space<vmem>>, vector<4x32xbf16>
    %cst_10 = arith.constant dense<0.000000e+00> : vector<16x32xf32>
    %17 = tpu.matmul %15, %16, %cst_10 {dimension_numbers = #tpu.dot_dimension_numbers<[1], [0], [0], [1], [0, 0, 1, 1], [], []>} : vector<16x4xbf16>, vector<4x32xbf16>, vector<16x32xf32> -> vector<16x32xf32>
    %18 = vector.extract_strided_slice %17 {offsets = [0, 0], sizes = [2, 32], strides = [1, 1]} : vector<16x32xf32> to vector<2x32xf32>
    %19 = arith.mulf %2, %17 : vector<16x32xf32>
    %cst_11 = arith.constant dense<0.000000e+00> : vector<16xf32>
    %20 = vector.multi_reduction <add>, %19, %cst_11 [1] : vector<16x32xf32> to vector<16xf32>
    %21 = vector.shape_cast %20 : vector<16xf32> to vector<16x1xf32>
    %c0_12 = arith.constant 0 : index
    %c0_13 = arith.constant 0 : index
    %22 = vector.load %arg3[%c0_12, %c0_13] : memref<16x1xf32, #tpu.memory_space<vmem>>, vector<16x1xf32>
    %cst_14 = arith.constant 5.000000e-01 : f32
    %23 = vector.broadcast %cst_14 : f32 to vector<16x1xf32>
    %24 = arith.cmpf oge, %22, %23 : vector<16x1xf32>
    %cst_15 = arith.constant -1.000000e+30 : f32
    %25 = vector.broadcast %cst_15 : f32 to vector<16x1xf32>
    %26 = arith.select %24, %21, %25 : vector<16x1xi1>, vector<16x1xf32>
    %27 = tpu.iota {dimensions = array<i32: 0>} : vector<16x2xi32>
    %28 = arith.sitofp %27 : vector<16x2xi32> to vector<16x2xf32>
    %29 = tpu.iota {dimensions = array<i32: 1>} : vector<16x2xi32>
    %30 = arith.sitofp %29 : vector<16x2xi32> to vector<16x2xf32>
    %cst_16 = arith.constant 5.000000e-01 : f32
    %31 = vector.broadcast %cst_16 : f32 to vector<16x2xf32>
    %32 = arith.addf %28, %31 : vector<16x2xf32>
    %cst_17 = arith.constant 5.000000e-01 : f32
    %33 = vector.broadcast %cst_17 : f32 to vector<16x2xf32>
    %34 = arith.mulf %32, %33 : vector<16x2xf32>
    %35 = math.floor %34 : vector<16x2xf32>
    %cst_18 = arith.constant 2.000000e+00 : f32
    %36 = vector.broadcast %cst_18 : f32 to vector<16x2xf32>
    %37 = arith.mulf %36, %35 : vector<16x2xf32>
    %38 = arith.subf %28, %37 : vector<16x2xf32>
    %39 = arith.cmpf oeq, %38, %30 : vector<16x2xf32>
    %40 = arith.extui %39 : vector<16x2xi1> to vector<16x2xi32>
    %41 = arith.sitofp %40 : vector<16x2xi32> to vector<16x2xf32>
    %cst_19 = arith.constant -1.000000e+30 : f32
    %42 = vector.shape_cast %26 : vector<16x1xf32> to vector<16x1xf32>
    %43 = vector.broadcast %42 : vector<16x1xf32> to vector<16x2xf32>
    %44 = vector.broadcast %cst_19 : f32 to vector<16x2xf32>
    %45 = arith.select %39, %43, %44 : vector<16x2xi1>, vector<16x2xf32>
    %cst_20 = arith.constant dense<0xFF800000> : vector<2xf32>
    %46 = vector.multi_reduction <maximumf>, %45, %cst_20 [0] : vector<16x2xf32> to vector<2xf32>
    %47 = vector.shape_cast %46 : vector<2xf32> to vector<1x2xf32>
    %cst_21 = arith.constant -1.000000e+30 : f32
    %48 = vector.shape_cast %47 : vector<1x2xf32> to vector<1x2xf32>
    %49 = vector.broadcast %48 : vector<1x2xf32> to vector<16x2xf32>
    %50 = vector.broadcast %cst_21 : f32 to vector<16x2xf32>
    %51 = arith.select %39, %49, %50 : vector<16x2xi1>, vector<16x2xf32>
    %cst_22 = arith.constant dense<0xFF800000> : vector<16xf32>
    %52 = vector.multi_reduction <maximumf>, %51, %cst_22 [1] : vector<16x2xf32> to vector<16xf32>
    %53 = vector.shape_cast %52 : vector<16xf32> to vector<16x1xf32>
    %54 = arith.subf %26, %53 : vector<16x1xf32>
    %55 = math.exp %54 : vector<16x1xf32>
    %cst_23 = arith.constant 0.000000e+00 : f32
    %56 = vector.broadcast %cst_23 : f32 to vector<16x1xf32>
    %57 = arith.select %24, %55, %56 : vector<16x1xi1>, vector<16x1xf32>
    %58 = vector.broadcast %57 : vector<16x1xf32> to vector<16x2xf32>
    %59 = arith.mulf %41, %58 : vector<16x2xf32>
    %cst_24 = arith.constant dense<0.000000e+00> : vector<2xf32>
    %60 = vector.multi_reduction <add>, %59, %cst_24 [0] : vector<16x2xf32> to vector<2xf32>
    %61 = vector.shape_cast %60 : vector<2xf32> to vector<1x2xf32>
    %62 = vector.broadcast %61 : vector<1x2xf32> to vector<16x2xf32>
    %63 = arith.mulf %41, %62 : vector<16x2xf32>
    %cst_25 = arith.constant dense<0.000000e+00> : vector<16xf32>
    %64 = vector.multi_reduction <add>, %63, %cst_25 [1] : vector<16x2xf32> to vector<16xf32>
    %65 = vector.shape_cast %64 : vector<16xf32> to vector<16x1xf32>
    %cst_26 = arith.constant 1.000000e-30 : f32
    %66 = vector.broadcast %cst_26 : f32 to vector<16x1xf32>
    %67 = arith.maximumf %65, %66 : vector<16x1xf32>
    %68 = tpu.reciprocal %67 {approx = true} : vector<16x1xf32> -> vector<16x1xf32>
    %69 = arith.mulf %57, %68 : vector<16x1xf32>
    %70 = vector.broadcast %69 : vector<16x1xf32> to vector<16x32xf32>
    %71 = arith.mulf %70, %17 : vector<16x32xf32>
    %72 = arith.truncf %71 : vector<16x32xf32> to vector<16x32xbf16>
    %c0_27 = arith.constant 0 : index
    %c0_28 = arith.constant 0 : index
    %73 = vector.load %arg6[%c0_27, %c0_28] : memref<32x32xbf16, #tpu.memory_space<vmem>>, vector<32x32xbf16>
    %cst_29 = arith.constant dense<0.000000e+00> : vector<16x32xf32>
    %74 = tpu.matmul %72, %73, %cst_29 {dimension_numbers = #tpu.dot_dimension_numbers<[1], [0], [0], [1], [0, 0, 1, 1], [], []>} : vector<16x32xbf16>, vector<32x32xbf16>, vector<16x32xf32> -> vector<16x32xf32>
    %75 = arith.truncf %2 : vector<16x32xf32> to vector<16x32xbf16>
    %c0_30 = arith.constant 0 : index
    %c0_31 = arith.constant 0 : index
    %76 = vector.load %arg7[%c0_30, %c0_31] : memref<32x32xbf16, #tpu.memory_space<vmem>>, vector<32x32xbf16>
    %cst_32 = arith.constant dense<0.000000e+00> : vector<16x32xf32>
    %77 = tpu.matmul %75, %76, %cst_32 {dimension_numbers = #tpu.dot_dimension_numbers<[1], [0], [0], [1], [0, 0, 1, 1], [], []>} : vector<16x32xbf16>, vector<32x32xbf16>, vector<16x32xf32> -> vector<16x32xf32>
    %78 = arith.addf %74, %77 : vector<16x32xf32>
    %79 = math.tanh %78 : vector<16x32xf32>
    %80 = arith.truncf %79 : vector<16x32xf32> to vector<16x32xbf16>
    %c0_33 = arith.constant 0 : index
    %c0_34 = arith.constant 0 : index
    %81 = vector.load %arg8[%c0_33, %c0_34] : memref<32x128xbf16, #tpu.memory_space<vmem>>, vector<32x128xbf16>
    %cst_35 = arith.constant dense<0.000000e+00> : vector<16x128xf32>
    %82 = tpu.matmul %80, %81, %cst_35 {dimension_numbers = #tpu.dot_dimension_numbers<[1], [0], [0], [1], [0, 0, 1, 1], [], []>} : vector<16x32xbf16>, vector<32x128xbf16>, vector<16x128xf32> -> vector<16x128xf32>
    %c0_36 = arith.constant 0 : index
    %c0_37 = arith.constant 0 : index
    %83 = vector.load %arg10[%c0_36, %c0_37] : memref<1x128xf32, #tpu.memory_space<vmem>>, vector<1x128xf32>
    %84 = vector.broadcast %83 : vector<1x128xf32> to vector<16x128xf32>
    %85 = arith.addf %82, %84 : vector<16x128xf32>
    %c0_38 = arith.constant 0 : index
    %c0_39 = arith.constant 0 : index
    %86 = vector.load %arg18[%c0_38, %c0_39] : memref<16x128xf32, #tpu.memory_space<vmem>>, vector<16x128xf32>
    tpu.vector_store %arg18[%c0_38, %c0_39], %85 {strides = array<i32>} : memref<16x128xf32, #tpu.memory_space<vmem>>, vector<16x128xf32>,
    %c0_40 = arith.constant 0 : index
    %c0_41 = arith.constant 0 : index
    %87 = vector.load %arg9[%c0_40, %c0_41] : memref<32x128xbf16, #tpu.memory_space<vmem>>, vector<32x128xbf16>
    %cst_42 = arith.constant dense<0.000000e+00> : vector<16x128xf32>
    %88 = tpu.matmul %80, %87, %cst_42 {dimension_numbers = #tpu.dot_dimension_numbers<[1], [0], [0], [1], [0, 0, 1, 1], [], []>} : vector<16x32xbf16>, vector<32x128xbf16>, vector<16x128xf32> -> vector<16x128xf32>
    %c0_43 = arith.constant 0 : index
    %c0_44 = arith.constant 0 : index
    %89 = vector.load %arg11[%c0_43, %c0_44] : memref<1x128xf32, #tpu.memory_space<vmem>>, vector<1x128xf32>
    %90 = vector.broadcast %89 : vector<1x128xf32> to vector<16x128xf32>
    %91 = arith.addf %88, %90 : vector<16x128xf32>
    %c0_45 = arith.constant 0 : index
    %c0_46 = arith.constant 0 : index
    %92 = vector.load %arg19[%c0_45, %c0_46] : memref<16x128xf32, #tpu.memory_space<vmem>>, vector<16x128xf32>
    tpu.vector_store %arg19[%c0_45, %c0_46], %91 {strides = array<i32>} : memref<16x128xf32, #tpu.memory_space<vmem>>, vector<16x128xf32>,
    %c0_47 = arith.constant 0 : index
    %c0_48 = arith.constant 0 : index
    %93 = vector.load %arg12[%c0_47, %c0_48] : memref<32x128xbf16, #tpu.memory_space<vmem>>, vector<32x128xbf16>
    %c0_49 = arith.constant 0 : index
    %c0_50 = arith.constant 0 : index
    %94 = vector.load %arg13[%c0_49, %c0_50] : memref<32x128xbf16, #tpu.memory_space<vmem>>, vector<32x128xbf16>
    %c0_i32 = arith.constant 0 : i32
    %c2_i32 = arith.constant 2 : i32
    %95 = arith.muli %c0_i32, %c2_i32 : i32
    %96 = tpu.assume_multiple %95, 2 : i32
    %c7_i32 = arith.constant 7 : i32
    %97 = arith.subi %c7_i32, %c0_i32 : i32
    %c2_i32_51 = arith.constant 2 : i32
    %98 = arith.muli %97, %c2_i32_51 : i32
    %99 = tpu.assume_multiple %98, 2 : i32
    %100 = arith.index_cast %96 : i32 to index
    %c0_52 = arith.constant 0 : index
    %101 = vector.load %arg18[%100, %c0_52] : memref<16x128xf32, #tpu.memory_space<vmem>>, vector<2x128xf32>
    %102 = arith.truncf %18 : vector<2x32xf32> to vector<2x32xbf16>
    %cst_53 = arith.constant dense<0.000000e+00> : vector<2x128xf32>
    %103 = tpu.matmul %102, %93, %cst_53 {dimension_numbers = #tpu.dot_dimension_numbers<[1], [0], [0], [1], [0, 0, 1, 1], [], []>} : vector<2x32xbf16>, vector<32x128xbf16>, vector<2x128xf32> -> vector<2x128xf32>
    %104 = arith.addf %101, %103 : vector<2x128xf32>
    %105 = arith.index_cast %99 : i32 to index
    %c0_54 = arith.constant 0 : index
    %106 = vector.load %arg19[%105, %c0_54] : memref<16x128xf32, #tpu.memory_space<vmem>>, vector<2x128xf32>
    %107 = arith.truncf %18 : vector<2x32xf32> to vector<2x32xbf16>
    %cst_55 = arith.constant dense<0.000000e+00> : vector<2x128xf32>
    %108 = tpu.matmul %107, %94, %cst_55 {dimension_numbers = #tpu.dot_dimension_numbers<[1], [0], [0], [1], [0, 0, 1, 1], [], []>} : vector<2x32xbf16>, vector<32x128xbf16>, vector<2x128xf32> -> vector<2x128xf32>
    %109 = arith.addf %106, %108 : vector<2x128xf32>
    %110 = vector.extract_strided_slice %104 {offsets = [0, 0], sizes = [2, 96], strides = [1, 1]} : vector<2x128xf32> to vector<2x96xf32>
    %111 = arith.negf %110 : vector<2x96xf32>
    %112 = math.exp %111 : vector<2x96xf32>
    %cst_56 = arith.constant 1.000000e+00 : f32
    %113 = vector.broadcast %cst_56 : f32 to vector<2x96xf32>
    %114 = arith.addf %113, %112 : vector<2x96xf32>
    %115 = arith.divf %113, %114 : vector<2x96xf32>
    %116 = vector.extract_strided_slice %104 {offsets = [0, 96], sizes = [2, 32], strides = [1, 1]} : vector<2x128xf32> to vector<2x32xf32>
    %117 = math.tanh %116 : vector<2x32xf32>
    %118 = vector.extract_strided_slice %115 {offsets = [0, 0], sizes = [2, 32], strides = [1, 1]} : vector<2x96xf32> to vector<2x32xf32>
    %119 = vector.extract_strided_slice %115 {offsets = [0, 32], sizes = [2, 32], strides = [1, 1]} : vector<2x96xf32> to vector<2x32xf32>
    %120 = vector.extract_strided_slice %115 {offsets = [0, 64], sizes = [2, 32], strides = [1, 1]} : vector<2x96xf32> to vector<2x32xf32>
    %121 = arith.mulf %119, %18 : vector<2x32xf32>
    %122 = arith.mulf %118, %117 : vector<2x32xf32>
    %123 = arith.addf %121, %122 : vector<2x32xf32>
    %124 = math.tanh %123 : vector<2x32xf32>
    %125 = arith.mulf %120, %124 : vector<2x32xf32>
    %126 = vector.extract_strided_slice %109 {offsets = [0, 0], sizes = [2, 96], strides = [1, 1]} : vector<2x128xf32> to vector<2x96xf32>
    %127 = arith.negf %126 : vector<2x96xf32>
    %128 = math.exp %127 : vector<2x96xf32>
    %cst_57 = arith.constant 1.000000e+00 : f32
    %129 = vector.broadcast %cst_57 : f32 to vector<2x96xf32>
    %130 = arith.addf %129, %128 : vector<2x96xf32>
    %131 = arith.divf %129, %130 : vector<2x96xf32>
    %132 = vector.extract_strided_slice %109 {offsets = [0, 96], sizes = [2, 32], strides = [1, 1]} : vector<2x128xf32> to vector<2x32xf32>
    %133 = math.tanh %132 : vector<2x32xf32>
    %134 = vector.extract_strided_slice %131 {offsets = [0, 0], sizes = [2, 32], strides = [1, 1]} : vector<2x96xf32> to vector<2x32xf32>
    %135 = vector.extract_strided_slice %131 {offsets = [0, 32], sizes = [2, 32], strides = [1, 1]} : vector<2x96xf32> to vector<2x32xf32>
    %136 = vector.extract_strided_slice %131 {offsets = [0, 64], sizes = [2, 32], strides = [1, 1]} : vector<2x96xf32> to vector<2x32xf32>
    %137 = arith.mulf %135, %18 : vector<2x32xf32>
    %138 = arith.mulf %134, %133 : vector<2x32xf32>
    %139 = arith.addf %137, %138 : vector<2x32xf32>
    %140 = math.tanh %139 : vector<2x32xf32>
    %141 = arith.mulf %136, %140 : vector<2x32xf32>
    %142 = arith.index_cast %96 : i32 to index
    %c0_58 = arith.constant 0 : index
    %143 = vector.load %arg20[%142, %c0_58] : memref<16x32xf32, #tpu.memory_space<vmem>>, vector<2x32xf32>
    tpu.vector_store %arg20[%142, %c0_58], %125 {strides = array<i32>} : memref<16x32xf32, #tpu.memory_space<vmem>>, vector<2x32xf32>,
    %144 = arith.index_cast %99 : i32 to index
    %c0_59 = arith.constant 0 : index
    %145 = vector.load %arg21[%144, %c0_59] : memref<16x32xf32, #tpu.memory_space<vmem>>, vector<2x32xf32>
    tpu.vector_store %arg21[%144, %c0_59], %141 {strides = array<i32>} : memref<16x32xf32, #tpu.memory_space<vmem>>, vector<2x32xf32>,
    %c1_i32 = arith.constant 1 : i32
    %c2_i32_60 = arith.constant 2 : i32
    %146 = arith.muli %c1_i32, %c2_i32_60 : i32
    %147 = tpu.assume_multiple %146, 2 : i32
    %c7_i32_61 = arith.constant 7 : i32
    %148 = arith.subi %c7_i32_61, %c1_i32 : i32
    %c2_i32_62 = arith.constant 2 : i32
    %149 = arith.muli %148, %c2_i32_62 : i32
    %150 = tpu.assume_multiple %149, 2 : i32
    %151 = arith.index_cast %147 : i32 to index
    %c0_63 = arith.constant 0 : index
    %152 = vector.load %arg18[%151, %c0_63] : memref<16x128xf32, #tpu.memory_space<vmem>>, vector<2x128xf32>
    %153 = arith.truncf %125 : vector<2x32xf32> to vector<2x32xbf16>
    %cst_64 = arith.constant dense<0.000000e+00> : vector<2x128xf32>
    %154 = tpu.matmul %153, %93, %cst_64 {dimension_numbers = #tpu.dot_dimension_numbers<[1], [0], [0], [1], [0, 0, 1, 1], [], []>} : vector<2x32xbf16>, vector<32x128xbf16>, vector<2x128xf32> -> vector<2x128xf32>
    %155 = arith.addf %152, %154 : vector<2x128xf32>
    %156 = arith.index_cast %150 : i32 to index
    %c0_65 = arith.constant 0 : index
    %157 = vector.load %arg19[%156, %c0_65] : memref<16x128xf32, #tpu.memory_space<vmem>>, vector<2x128xf32>
    %158 = arith.truncf %141 : vector<2x32xf32> to vector<2x32xbf16>
    %cst_66 = arith.constant dense<0.000000e+00> : vector<2x128xf32>
    %159 = tpu.matmul %158, %94, %cst_66 {dimension_numbers = #tpu.dot_dimension_numbers<[1], [0], [0], [1], [0, 0, 1, 1], [], []>} : vector<2x32xbf16>, vector<32x128xbf16>, vector<2x128xf32> -> vector<2x128xf32>
    %160 = arith.addf %157, %159 : vector<2x128xf32>
    %161 = vector.extract_strided_slice %155 {offsets = [0, 0], sizes = [2, 96], strides = [1, 1]} : vector<2x128xf32> to vector<2x96xf32>
    %162 = arith.negf %161 : vector<2x96xf32>
    %163 = math.exp %162 : vector<2x96xf32>
    %cst_67 = arith.constant 1.000000e+00 : f32
    %164 = vector.broadcast %cst_67 : f32 to vector<2x96xf32>
    %165 = arith.addf %164, %163 : vector<2x96xf32>
    %166 = arith.divf %164, %165 : vector<2x96xf32>
    %167 = vector.extract_strided_slice %155 {offsets = [0, 96], sizes = [2, 32], strides = [1, 1]} : vector<2x128xf32> to vector<2x32xf32>
    %168 = math.tanh %167 : vector<2x32xf32>
    %169 = vector.extract_strided_slice %166 {offsets = [0, 0], sizes = [2, 32], strides = [1, 1]} : vector<2x96xf32> to vector<2x32xf32>
    %170 = vector.extract_strided_slice %166 {offsets = [0, 32], sizes = [2, 32], strides = [1, 1]} : vector<2x96xf32> to vector<2x32xf32>
    %171 = vector.extract_strided_slice %166 {offsets = [0, 64], sizes = [2, 32], strides = [1, 1]} : vector<2x96xf32> to vector<2x32xf32>
    %172 = arith.mulf %170, %123 : vector<2x32xf32>
    %173 = arith.mulf %169, %168 : vector<2x32xf32>
    %174 = arith.addf %172, %173 : vector<2x32xf32>
    %175 = math.tanh %174 : vector<2x32xf32>
    %176 = arith.mulf %171, %175 : vector<2x32xf32>
    %177 = vector.extract_strided_slice %160 {offsets = [0, 0], sizes = [2, 96], strides = [1, 1]} : vector<2x128xf32> to vector<2x96xf32>
    %178 = arith.negf %177 : vector<2x96xf32>
    %179 = math.exp %178 : vector<2x96xf32>
    %cst_68 = arith.constant 1.000000e+00 : f32
    %180 = vector.broadcast %cst_68 : f32 to vector<2x96xf32>
    %181 = arith.addf %180, %179 : vector<2x96xf32>
    %182 = arith.divf %180, %181 : vector<2x96xf32>
    %183 = vector.extract_strided_slice %160 {offsets = [0, 96], sizes = [2, 32], strides = [1, 1]} : vector<2x128xf32> to vector<2x32xf32>
    %184 = math.tanh %183 : vector<2x32xf32>
    %185 = vector.extract_strided_slice %182 {offsets = [0, 0], sizes = [2, 32], strides = [1, 1]} : vector<2x96xf32> to vector<2x32xf32>
    %186 = vector.extract_strided_slice %182 {offsets = [0, 32], sizes = [2, 32], strides = [1, 1]} : vector<2x96xf32> to vector<2x32xf32>
    %187 = vector.extract_strided_slice %182 {offsets = [0, 64], sizes = [2, 32], strides = [1, 1]} : vector<2x96xf32> to vector<2x32xf32>
    %188 = arith.mulf %186, %139 : vector<2x32xf32>
    %189 = arith.mulf %185, %184 : vector<2x32xf32>
    %190 = arith.addf %188, %189 : vector<2x32xf32>
    %191 = math.tanh %190 : vector<2x32xf32>
    %192 = arith.mulf %187, %191 : vector<2x32xf32>
    %193 = arith.index_cast %147 : i32 to index
    %c0_69 = arith.constant 0 : index
    %194 = vector.load %arg20[%193, %c0_69] : memref<16x32xf32, #tpu.memory_space<vmem>>, vector<2x32xf32>
    tpu.vector_store %arg20[%193, %c0_69], %176 {strides = array<i32>} : memref<16x32xf32, #tpu.memory_space<vmem>>, vector<2x32xf32>,
    %195 = arith.index_cast %150 : i32 to index
    %c0_70 = arith.constant 0 : index
    %196 = vector.load %arg21[%195, %c0_70] : memref<16x32xf32, #tpu.memory_space<vmem>>, vector<2x32xf32>
    tpu.vector_store %arg21[%195, %c0_70], %192 {strides = array<i32>} : memref<16x32xf32, #tpu.memory_space<vmem>>, vector<2x32xf32>,
    %c2_i32_71 = arith.constant 2 : i32
    %c2_i32_72 = arith.constant 2 : i32
    %197 = arith.muli %c2_i32_71, %c2_i32_72 : i32
    %198 = tpu.assume_multiple %197, 2 : i32
    %c7_i32_73 = arith.constant 7 : i32
    %199 = arith.subi %c7_i32_73, %c2_i32_71 : i32
    %c2_i32_74 = arith.constant 2 : i32
    %200 = arith.muli %199, %c2_i32_74 : i32
    %201 = tpu.assume_multiple %200, 2 : i32
    %202 = arith.index_cast %198 : i32 to index
    %c0_75 = arith.constant 0 : index
    %203 = vector.load %arg18[%202, %c0_75] : memref<16x128xf32, #tpu.memory_space<vmem>>, vector<2x128xf32>
    %204 = arith.truncf %176 : vector<2x32xf32> to vector<2x32xbf16>
    %cst_76 = arith.constant dense<0.000000e+00> : vector<2x128xf32>
    %205 = tpu.matmul %204, %93, %cst_76 {dimension_numbers = #tpu.dot_dimension_numbers<[1], [0], [0], [1], [0, 0, 1, 1], [], []>} : vector<2x32xbf16>, vector<32x128xbf16>, vector<2x128xf32> -> vector<2x128xf32>
    %206 = arith.addf %203, %205 : vector<2x128xf32>
    %207 = arith.index_cast %201 : i32 to index
    %c0_77 = arith.constant 0 : index
    %208 = vector.load %arg19[%207, %c0_77] : memref<16x128xf32, #tpu.memory_space<vmem>>, vector<2x128xf32>
    %209 = arith.truncf %192 : vector<2x32xf32> to vector<2x32xbf16>
    %cst_78 = arith.constant dense<0.000000e+00> : vector<2x128xf32>
    %210 = tpu.matmul %209, %94, %cst_78 {dimension_numbers = #tpu.dot_dimension_numbers<[1], [0], [0], [1], [0, 0, 1, 1], [], []>} : vector<2x32xbf16>, vector<32x128xbf16>, vector<2x128xf32> -> vector<2x128xf32>
    %211 = arith.addf %208, %210 : vector<2x128xf32>
    %212 = vector.extract_strided_slice %206 {offsets = [0, 0], sizes = [2, 96], strides = [1, 1]} : vector<2x128xf32> to vector<2x96xf32>
    %213 = arith.negf %212 : vector<2x96xf32>
    %214 = math.exp %213 : vector<2x96xf32>
    %cst_79 = arith.constant 1.000000e+00 : f32
    %215 = vector.broadcast %cst_79 : f32 to vector<2x96xf32>
    %216 = arith.addf %215, %214 : vector<2x96xf32>
    %217 = arith.divf %215, %216 : vector<2x96xf32>
    %218 = vector.extract_strided_slice %206 {offsets = [0, 96], sizes = [2, 32], strides = [1, 1]} : vector<2x128xf32> to vector<2x32xf32>
    %219 = math.tanh %218 : vector<2x32xf32>
    %220 = vector.extract_strided_slice %217 {offsets = [0, 0], sizes = [2, 32], strides = [1, 1]} : vector<2x96xf32> to vector<2x32xf32>
    %221 = vector.extract_strided_slice %217 {offsets = [0, 32], sizes = [2, 32], strides = [1, 1]} : vector<2x96xf32> to vector<2x32xf32>
    %222 = vector.extract_strided_slice %217 {offsets = [0, 64], sizes = [2, 32], strides = [1, 1]} : vector<2x96xf32> to vector<2x32xf32>
    %223 = arith.mulf %221, %174 : vector<2x32xf32>
    %224 = arith.mulf %220, %219 : vector<2x32xf32>
    %225 = arith.addf %223, %224 : vector<2x32xf32>
    %226 = math.tanh %225 : vector<2x32xf32>
    %227 = arith.mulf %222, %226 : vector<2x32xf32>
    %228 = vector.extract_strided_slice %211 {offsets = [0, 0], sizes = [2, 96], strides = [1, 1]} : vector<2x128xf32> to vector<2x96xf32>
    %229 = arith.negf %228 : vector<2x96xf32>
    %230 = math.exp %229 : vector<2x96xf32>
    %cst_80 = arith.constant 1.000000e+00 : f32
    %231 = vector.broadcast %cst_80 : f32 to vector<2x96xf32>
    %232 = arith.addf %231, %230 : vector<2x96xf32>
    %233 = arith.divf %231, %232 : vector<2x96xf32>
    %234 = vector.extract_strided_slice %211 {offsets = [0, 96], sizes = [2, 32], strides = [1, 1]} : vector<2x128xf32> to vector<2x32xf32>
    %235 = math.tanh %234 : vector<2x32xf32>
    %236 = vector.extract_strided_slice %233 {offsets = [0, 0], sizes = [2, 32], strides = [1, 1]} : vector<2x96xf32> to vector<2x32xf32>
    %237 = vector.extract_strided_slice %233 {offsets = [0, 32], sizes = [2, 32], strides = [1, 1]} : vector<2x96xf32> to vector<2x32xf32>
    %238 = vector.extract_strided_slice %233 {offsets = [0, 64], sizes = [2, 32], strides = [1, 1]} : vector<2x96xf32> to vector<2x32xf32>
    %239 = arith.mulf %237, %190 : vector<2x32xf32>
    %240 = arith.mulf %236, %235 : vector<2x32xf32>
    %241 = arith.addf %239, %240 : vector<2x32xf32>
    %242 = math.tanh %241 : vector<2x32xf32>
    %243 = arith.mulf %238, %242 : vector<2x32xf32>
    %244 = arith.index_cast %198 : i32 to index
    %c0_81 = arith.constant 0 : index
    %245 = vector.load %arg20[%244, %c0_81] : memref<16x32xf32, #tpu.memory_space<vmem>>, vector<2x32xf32>
    tpu.vector_store %arg20[%244, %c0_81], %227 {strides = array<i32>} : memref<16x32xf32, #tpu.memory_space<vmem>>, vector<2x32xf32>,
    %246 = arith.index_cast %201 : i32 to index
    %c0_82 = arith.constant 0 : index
    %247 = vector.load %arg21[%246, %c0_82] : memref<16x32xf32, #tpu.memory_space<vmem>>, vector<2x32xf32>
    tpu.vector_store %arg21[%246, %c0_82], %243 {strides = array<i32>} : memref<16x32xf32, #tpu.memory_space<vmem>>, vector<2x32xf32>,
    %c3_i32 = arith.constant 3 : i32
    %c2_i32_83 = arith.constant 2 : i32
    %248 = arith.muli %c3_i32, %c2_i32_83 : i32
    %249 = tpu.assume_multiple %248, 2 : i32
    %c7_i32_84 = arith.constant 7 : i32
    %250 = arith.subi %c7_i32_84, %c3_i32 : i32
    %c2_i32_85 = arith.constant 2 : i32
    %251 = arith.muli %250, %c2_i32_85 : i32
    %252 = tpu.assume_multiple %251, 2 : i32
    %253 = arith.index_cast %249 : i32 to index
    %c0_86 = arith.constant 0 : index
    %254 = vector.load %arg18[%253, %c0_86] : memref<16x128xf32, #tpu.memory_space<vmem>>, vector<2x128xf32>
    %255 = arith.truncf %227 : vector<2x32xf32> to vector<2x32xbf16>
    %cst_87 = arith.constant dense<0.000000e+00> : vector<2x128xf32>
    %256 = tpu.matmul %255, %93, %cst_87 {dimension_numbers = #tpu.dot_dimension_numbers<[1], [0], [0], [1], [0, 0, 1, 1], [], []>} : vector<2x32xbf16>, vector<32x128xbf16>, vector<2x128xf32> -> vector<2x128xf32>
    %257 = arith.addf %254, %256 : vector<2x128xf32>
    %258 = arith.index_cast %252 : i32 to index
    %c0_88 = arith.constant 0 : index
    %259 = vector.load %arg19[%258, %c0_88] : memref<16x128xf32, #tpu.memory_space<vmem>>, vector<2x128xf32>
    %260 = arith.truncf %243 : vector<2x32xf32> to vector<2x32xbf16>
    %cst_89 = arith.constant dense<0.000000e+00> : vector<2x128xf32>
    %261 = tpu.matmul %260, %94, %cst_89 {dimension_numbers = #tpu.dot_dimension_numbers<[1], [0], [0], [1], [0, 0, 1, 1], [], []>} : vector<2x32xbf16>, vector<32x128xbf16>, vector<2x128xf32> -> vector<2x128xf32>
    %262 = arith.addf %259, %261 : vector<2x128xf32>
    %263 = vector.extract_strided_slice %257 {offsets = [0, 0], sizes = [2, 96], strides = [1, 1]} : vector<2x128xf32> to vector<2x96xf32>
    %264 = arith.negf %263 : vector<2x96xf32>
    %265 = math.exp %264 : vector<2x96xf32>
    %cst_90 = arith.constant 1.000000e+00 : f32
    %266 = vector.broadcast %cst_90 : f32 to vector<2x96xf32>
    %267 = arith.addf %266, %265 : vector<2x96xf32>
    %268 = arith.divf %266, %267 : vector<2x96xf32>
    %269 = vector.extract_strided_slice %257 {offsets = [0, 96], sizes = [2, 32], strides = [1, 1]} : vector<2x128xf32> to vector<2x32xf32>
    %270 = math.tanh %269 : vector<2x32xf32>
    %271 = vector.extract_strided_slice %268 {offsets = [0, 0], sizes = [2, 32], strides = [1, 1]} : vector<2x96xf32> to vector<2x32xf32>
    %272 = vector.extract_strided_slice %268 {offsets = [0, 32], sizes = [2, 32], strides = [1, 1]} : vector<2x96xf32> to vector<2x32xf32>
    %273 = vector.extract_strided_slice %268 {offsets = [0, 64], sizes = [2, 32], strides = [1, 1]} : vector<2x96xf32> to vector<2x32xf32>
    %274 = arith.mulf %272, %225 : vector<2x32xf32>
    %275 = arith.mulf %271, %270 : vector<2x32xf32>
    %276 = arith.addf %274, %275 : vector<2x32xf32>
    %277 = math.tanh %276 : vector<2x32xf32>
    %278 = arith.mulf %273, %277 : vector<2x32xf32>
    %279 = vector.extract_strided_slice %262 {offsets = [0, 0], sizes = [2, 96], strides = [1, 1]} : vector<2x128xf32> to vector<2x96xf32>
    %280 = arith.negf %279 : vector<2x96xf32>
    %281 = math.exp %280 : vector<2x96xf32>
    %cst_91 = arith.constant 1.000000e+00 : f32
    %282 = vector.broadcast %cst_91 : f32 to vector<2x96xf32>
    %283 = arith.addf %282, %281 : vector<2x96xf32>
    %284 = arith.divf %282, %283 : vector<2x96xf32>
    %285 = vector.extract_strided_slice %262 {offsets = [0, 96], sizes = [2, 32], strides = [1, 1]} : vector<2x128xf32> to vector<2x32xf32>
    %286 = math.tanh %285 : vector<2x32xf32>
    %287 = vector.extract_strided_slice %284 {offsets = [0, 0], sizes = [2, 32], strides = [1, 1]} : vector<2x96xf32> to vector<2x32xf32>
    %288 = vector.extract_strided_slice %284 {offsets = [0, 32], sizes = [2, 32], strides = [1, 1]} : vector<2x96xf32> to vector<2x32xf32>
    %289 = vector.extract_strided_slice %284 {offsets = [0, 64], sizes = [2, 32], strides = [1, 1]} : vector<2x96xf32> to vector<2x32xf32>
    %290 = arith.mulf %288, %241 : vector<2x32xf32>
    %291 = arith.mulf %287, %286 : vector<2x32xf32>
    %292 = arith.addf %290, %291 : vector<2x32xf32>
    %293 = math.tanh %292 : vector<2x32xf32>
    %294 = arith.mulf %289, %293 : vector<2x32xf32>
    %295 = arith.index_cast %249 : i32 to index
    %c0_92 = arith.constant 0 : index
    %296 = vector.load %arg20[%295, %c0_92] : memref<16x32xf32, #tpu.memory_space<vmem>>, vector<2x32xf32>
    tpu.vector_store %arg20[%295, %c0_92], %278 {strides = array<i32>} : memref<16x32xf32, #tpu.memory_space<vmem>>, vector<2x32xf32>,
    %297 = arith.index_cast %252 : i32 to index
    %c0_93 = arith.constant 0 : index
    %298 = vector.load %arg21[%297, %c0_93] : memref<16x32xf32, #tpu.memory_space<vmem>>, vector<2x32xf32>
    tpu.vector_store %arg21[%297, %c0_93], %294 {strides = array<i32>} : memref<16x32xf32, #tpu.memory_space<vmem>>, vector<2x32xf32>,
    %c4_i32 = arith.constant 4 : i32
    %c2_i32_94 = arith.constant 2 : i32
    %299 = arith.muli %c4_i32, %c2_i32_94 : i32
    %300 = tpu.assume_multiple %299, 2 : i32
    %c7_i32_95 = arith.constant 7 : i32
    %301 = arith.subi %c7_i32_95, %c4_i32 : i32
    %c2_i32_96 = arith.constant 2 : i32
    %302 = arith.muli %301, %c2_i32_96 : i32
    %303 = tpu.assume_multiple %302, 2 : i32
    %304 = arith.index_cast %300 : i32 to index
    %c0_97 = arith.constant 0 : index
    %305 = vector.load %arg18[%304, %c0_97] : memref<16x128xf32, #tpu.memory_space<vmem>>, vector<2x128xf32>
    %306 = arith.truncf %278 : vector<2x32xf32> to vector<2x32xbf16>
    %cst_98 = arith.constant dense<0.000000e+00> : vector<2x128xf32>
    %307 = tpu.matmul %306, %93, %cst_98 {dimension_numbers = #tpu.dot_dimension_numbers<[1], [0], [0], [1], [0, 0, 1, 1], [], []>} : vector<2x32xbf16>, vector<32x128xbf16>, vector<2x128xf32> -> vector<2x128xf32>
    %308 = arith.addf %305, %307 : vector<2x128xf32>
    %309 = arith.index_cast %303 : i32 to index
    %c0_99 = arith.constant 0 : index
    %310 = vector.load %arg19[%309, %c0_99] : memref<16x128xf32, #tpu.memory_space<vmem>>, vector<2x128xf32>
    %311 = arith.truncf %294 : vector<2x32xf32> to vector<2x32xbf16>
    %cst_100 = arith.constant dense<0.000000e+00> : vector<2x128xf32>
    %312 = tpu.matmul %311, %94, %cst_100 {dimension_numbers = #tpu.dot_dimension_numbers<[1], [0], [0], [1], [0, 0, 1, 1], [], []>} : vector<2x32xbf16>, vector<32x128xbf16>, vector<2x128xf32> -> vector<2x128xf32>
    %313 = arith.addf %310, %312 : vector<2x128xf32>
    %314 = vector.extract_strided_slice %308 {offsets = [0, 0], sizes = [2, 96], strides = [1, 1]} : vector<2x128xf32> to vector<2x96xf32>
    %315 = arith.negf %314 : vector<2x96xf32>
    %316 = math.exp %315 : vector<2x96xf32>
    %cst_101 = arith.constant 1.000000e+00 : f32
    %317 = vector.broadcast %cst_101 : f32 to vector<2x96xf32>
    %318 = arith.addf %317, %316 : vector<2x96xf32>
    %319 = arith.divf %317, %318 : vector<2x96xf32>
    %320 = vector.extract_strided_slice %308 {offsets = [0, 96], sizes = [2, 32], strides = [1, 1]} : vector<2x128xf32> to vector<2x32xf32>
    %321 = math.tanh %320 : vector<2x32xf32>
    %322 = vector.extract_strided_slice %319 {offsets = [0, 0], sizes = [2, 32], strides = [1, 1]} : vector<2x96xf32> to vector<2x32xf32>
    %323 = vector.extract_strided_slice %319 {offsets = [0, 32], sizes = [2, 32], strides = [1, 1]} : vector<2x96xf32> to vector<2x32xf32>
    %324 = vector.extract_strided_slice %319 {offsets = [0, 64], sizes = [2, 32], strides = [1, 1]} : vector<2x96xf32> to vector<2x32xf32>
    %325 = arith.mulf %323, %276 : vector<2x32xf32>
    %326 = arith.mulf %322, %321 : vector<2x32xf32>
    %327 = arith.addf %325, %326 : vector<2x32xf32>
    %328 = math.tanh %327 : vector<2x32xf32>
    %329 = arith.mulf %324, %328 : vector<2x32xf32>
    %330 = vector.extract_strided_slice %313 {offsets = [0, 0], sizes = [2, 96], strides = [1, 1]} : vector<2x128xf32> to vector<2x96xf32>
    %331 = arith.negf %330 : vector<2x96xf32>
    %332 = math.exp %331 : vector<2x96xf32>
    %cst_102 = arith.constant 1.000000e+00 : f32
    %333 = vector.broadcast %cst_102 : f32 to vector<2x96xf32>
    %334 = arith.addf %333, %332 : vector<2x96xf32>
    %335 = arith.divf %333, %334 : vector<2x96xf32>
    %336 = vector.extract_strided_slice %313 {offsets = [0, 96], sizes = [2, 32], strides = [1, 1]} : vector<2x128xf32> to vector<2x32xf32>
    %337 = math.tanh %336 : vector<2x32xf32>
    %338 = vector.extract_strided_slice %335 {offsets = [0, 0], sizes = [2, 32], strides = [1, 1]} : vector<2x96xf32> to vector<2x32xf32>
    %339 = vector.extract_strided_slice %335 {offsets = [0, 32], sizes = [2, 32], strides = [1, 1]} : vector<2x96xf32> to vector<2x32xf32>
    %340 = vector.extract_strided_slice %335 {offsets = [0, 64], sizes = [2, 32], strides = [1, 1]} : vector<2x96xf32> to vector<2x32xf32>
    %341 = arith.mulf %339, %292 : vector<2x32xf32>
    %342 = arith.mulf %338, %337 : vector<2x32xf32>
    %343 = arith.addf %341, %342 : vector<2x32xf32>
    %344 = math.tanh %343 : vector<2x32xf32>
    %345 = arith.mulf %340, %344 : vector<2x32xf32>
    %346 = arith.index_cast %300 : i32 to index
    %c0_103 = arith.constant 0 : index
    %347 = vector.load %arg20[%346, %c0_103] : memref<16x32xf32, #tpu.memory_space<vmem>>, vector<2x32xf32>
    tpu.vector_store %arg20[%346, %c0_103], %329 {strides = array<i32>} : memref<16x32xf32, #tpu.memory_space<vmem>>, vector<2x32xf32>,
    %348 = arith.index_cast %303 : i32 to index
    %c0_104 = arith.constant 0 : index
    %349 = vector.load %arg21[%348, %c0_104] : memref<16x32xf32, #tpu.memory_space<vmem>>, vector<2x32xf32>
    tpu.vector_store %arg21[%348, %c0_104], %345 {strides = array<i32>} : memref<16x32xf32, #tpu.memory_space<vmem>>, vector<2x32xf32>,
    %c5_i32 = arith.constant 5 : i32
    %c2_i32_105 = arith.constant 2 : i32
    %350 = arith.muli %c5_i32, %c2_i32_105 : i32
    %351 = tpu.assume_multiple %350, 2 : i32
    %c7_i32_106 = arith.constant 7 : i32
    %352 = arith.subi %c7_i32_106, %c5_i32 : i32
    %c2_i32_107 = arith.constant 2 : i32
    %353 = arith.muli %352, %c2_i32_107 : i32
    %354 = tpu.assume_multiple %353, 2 : i32
    %355 = arith.index_cast %351 : i32 to index
    %c0_108 = arith.constant 0 : index
    %356 = vector.load %arg18[%355, %c0_108] : memref<16x128xf32, #tpu.memory_space<vmem>>, vector<2x128xf32>
    %357 = arith.truncf %329 : vector<2x32xf32> to vector<2x32xbf16>
    %cst_109 = arith.constant dense<0.000000e+00> : vector<2x128xf32>
    %358 = tpu.matmul %357, %93, %cst_109 {dimension_numbers = #tpu.dot_dimension_numbers<[1], [0], [0], [1], [0, 0, 1, 1], [], []>} : vector<2x32xbf16>, vector<32x128xbf16>, vector<2x128xf32> -> vector<2x128xf32>
    %359 = arith.addf %356, %358 : vector<2x128xf32>
    %360 = arith.index_cast %354 : i32 to index
    %c0_110 = arith.constant 0 : index
    %361 = vector.load %arg19[%360, %c0_110] : memref<16x128xf32, #tpu.memory_space<vmem>>, vector<2x128xf32>
    %362 = arith.truncf %345 : vector<2x32xf32> to vector<2x32xbf16>
    %cst_111 = arith.constant dense<0.000000e+00> : vector<2x128xf32>
    %363 = tpu.matmul %362, %94, %cst_111 {dimension_numbers = #tpu.dot_dimension_numbers<[1], [0], [0], [1], [0, 0, 1, 1], [], []>} : vector<2x32xbf16>, vector<32x128xbf16>, vector<2x128xf32> -> vector<2x128xf32>
    %364 = arith.addf %361, %363 : vector<2x128xf32>
    %365 = vector.extract_strided_slice %359 {offsets = [0, 0], sizes = [2, 96], strides = [1, 1]} : vector<2x128xf32> to vector<2x96xf32>
    %366 = arith.negf %365 : vector<2x96xf32>
    %367 = math.exp %366 : vector<2x96xf32>
    %cst_112 = arith.constant 1.000000e+00 : f32
    %368 = vector.broadcast %cst_112 : f32 to vector<2x96xf32>
    %369 = arith.addf %368, %367 : vector<2x96xf32>
    %370 = arith.divf %368, %369 : vector<2x96xf32>
    %371 = vector.extract_strided_slice %359 {offsets = [0, 96], sizes = [2, 32], strides = [1, 1]} : vector<2x128xf32> to vector<2x32xf32>
    %372 = math.tanh %371 : vector<2x32xf32>
    %373 = vector.extract_strided_slice %370 {offsets = [0, 0], sizes = [2, 32], strides = [1, 1]} : vector<2x96xf32> to vector<2x32xf32>
    %374 = vector.extract_strided_slice %370 {offsets = [0, 32], sizes = [2, 32], strides = [1, 1]} : vector<2x96xf32> to vector<2x32xf32>
    %375 = vector.extract_strided_slice %370 {offsets = [0, 64], sizes = [2, 32], strides = [1, 1]} : vector<2x96xf32> to vector<2x32xf32>
    %376 = arith.mulf %374, %327 : vector<2x32xf32>
    %377 = arith.mulf %373, %372 : vector<2x32xf32>
    %378 = arith.addf %376, %377 : vector<2x32xf32>
    %379 = math.tanh %378 : vector<2x32xf32>
    %380 = arith.mulf %375, %379 : vector<2x32xf32>
    %381 = vector.extract_strided_slice %364 {offsets = [0, 0], sizes = [2, 96], strides = [1, 1]} : vector<2x128xf32> to vector<2x96xf32>
    %382 = arith.negf %381 : vector<2x96xf32>
    %383 = math.exp %382 : vector<2x96xf32>
    %cst_113 = arith.constant 1.000000e+00 : f32
    %384 = vector.broadcast %cst_113 : f32 to vector<2x96xf32>
    %385 = arith.addf %384, %383 : vector<2x96xf32>
    %386 = arith.divf %384, %385 : vector<2x96xf32>
    %387 = vector.extract_strided_slice %364 {offsets = [0, 96], sizes = [2, 32], strides = [1, 1]} : vector<2x128xf32> to vector<2x32xf32>
    %388 = math.tanh %387 : vector<2x32xf32>
    %389 = vector.extract_strided_slice %386 {offsets = [0, 0], sizes = [2, 32], strides = [1, 1]} : vector<2x96xf32> to vector<2x32xf32>
    %390 = vector.extract_strided_slice %386 {offsets = [0, 32], sizes = [2, 32], strides = [1, 1]} : vector<2x96xf32> to vector<2x32xf32>
    %391 = vector.extract_strided_slice %386 {offsets = [0, 64], sizes = [2, 32], strides = [1, 1]} : vector<2x96xf32> to vector<2x32xf32>
    %392 = arith.mulf %390, %343 : vector<2x32xf32>
    %393 = arith.mulf %389, %388 : vector<2x32xf32>
    %394 = arith.addf %392, %393 : vector<2x32xf32>
    %395 = math.tanh %394 : vector<2x32xf32>
    %396 = arith.mulf %391, %395 : vector<2x32xf32>
    %397 = arith.index_cast %351 : i32 to index
    %c0_114 = arith.constant 0 : index
    %398 = vector.load %arg20[%397, %c0_114] : memref<16x32xf32, #tpu.memory_space<vmem>>, vector<2x32xf32>
    tpu.vector_store %arg20[%397, %c0_114], %380 {strides = array<i32>} : memref<16x32xf32, #tpu.memory_space<vmem>>, vector<2x32xf32>,
    %399 = arith.index_cast %354 : i32 to index
    %c0_115 = arith.constant 0 : index
    %400 = vector.load %arg21[%399, %c0_115] : memref<16x32xf32, #tpu.memory_space<vmem>>, vector<2x32xf32>
    tpu.vector_store %arg21[%399, %c0_115], %396 {strides = array<i32>} : memref<16x32xf32, #tpu.memory_space<vmem>>, vector<2x32xf32>,
    %c6_i32 = arith.constant 6 : i32
    %c2_i32_116 = arith.constant 2 : i32
    %401 = arith.muli %c6_i32, %c2_i32_116 : i32
    %402 = tpu.assume_multiple %401, 2 : i32
    %c7_i32_117 = arith.constant 7 : i32
    %403 = arith.subi %c7_i32_117, %c6_i32 : i32
    %c2_i32_118 = arith.constant 2 : i32
    %404 = arith.muli %403, %c2_i32_118 : i32
    %405 = tpu.assume_multiple %404, 2 : i32
    %406 = arith.index_cast %402 : i32 to index
    %c0_119 = arith.constant 0 : index
    %407 = vector.load %arg18[%406, %c0_119] : memref<16x128xf32, #tpu.memory_space<vmem>>, vector<2x128xf32>
    %408 = arith.truncf %380 : vector<2x32xf32> to vector<2x32xbf16>
    %cst_120 = arith.constant dense<0.000000e+00> : vector<2x128xf32>
    %409 = tpu.matmul %408, %93, %cst_120 {dimension_numbers = #tpu.dot_dimension_numbers<[1], [0], [0], [1], [0, 0, 1, 1], [], []>} : vector<2x32xbf16>, vector<32x128xbf16>, vector<2x128xf32> -> vector<2x128xf32>
    %410 = arith.addf %407, %409 : vector<2x128xf32>
    %411 = arith.index_cast %405 : i32 to index
    %c0_121 = arith.constant 0 : index
    %412 = vector.load %arg19[%411, %c0_121] : memref<16x128xf32, #tpu.memory_space<vmem>>, vector<2x128xf32>
    %413 = arith.truncf %396 : vector<2x32xf32> to vector<2x32xbf16>
    %cst_122 = arith.constant dense<0.000000e+00> : vector<2x128xf32>
    %414 = tpu.matmul %413, %94, %cst_122 {dimension_numbers = #tpu.dot_dimension_numbers<[1], [0], [0], [1], [0, 0, 1, 1], [], []>} : vector<2x32xbf16>, vector<32x128xbf16>, vector<2x128xf32> -> vector<2x128xf32>
    %415 = arith.addf %412, %414 : vector<2x128xf32>
    %416 = vector.extract_strided_slice %410 {offsets = [0, 0], sizes = [2, 96], strides = [1, 1]} : vector<2x128xf32> to vector<2x96xf32>
    %417 = arith.negf %416 : vector<2x96xf32>
    %418 = math.exp %417 : vector<2x96xf32>
    %cst_123 = arith.constant 1.000000e+00 : f32
    %419 = vector.broadcast %cst_123 : f32 to vector<2x96xf32>
    %420 = arith.addf %419, %418 : vector<2x96xf32>
    %421 = arith.divf %419, %420 : vector<2x96xf32>
    %422 = vector.extract_strided_slice %410 {offsets = [0, 96], sizes = [2, 32], strides = [1, 1]} : vector<2x128xf32> to vector<2x32xf32>
    %423 = math.tanh %422 : vector<2x32xf32>
    %424 = vector.extract_strided_slice %421 {offsets = [0, 0], sizes = [2, 32], strides = [1, 1]} : vector<2x96xf32> to vector<2x32xf32>
    %425 = vector.extract_strided_slice %421 {offsets = [0, 32], sizes = [2, 32], strides = [1, 1]} : vector<2x96xf32> to vector<2x32xf32>
    %426 = vector.extract_strided_slice %421 {offsets = [0, 64], sizes = [2, 32], strides = [1, 1]} : vector<2x96xf32> to vector<2x32xf32>
    %427 = arith.mulf %425, %378 : vector<2x32xf32>
    %428 = arith.mulf %424, %423 : vector<2x32xf32>
    %429 = arith.addf %427, %428 : vector<2x32xf32>
    %430 = math.tanh %429 : vector<2x32xf32>
    %431 = arith.mulf %426, %430 : vector<2x32xf32>
    %432 = vector.extract_strided_slice %415 {offsets = [0, 0], sizes = [2, 96], strides = [1, 1]} : vector<2x128xf32> to vector<2x96xf32>
    %433 = arith.negf %432 : vector<2x96xf32>
    %434 = math.exp %433 : vector<2x96xf32>
    %cst_124 = arith.constant 1.000000e+00 : f32
    %435 = vector.broadcast %cst_124 : f32 to vector<2x96xf32>
    %436 = arith.addf %435, %434 : vector<2x96xf32>
    %437 = arith.divf %435, %436 : vector<2x96xf32>
    %438 = vector.extract_strided_slice %415 {offsets = [0, 96], sizes = [2, 32], strides = [1, 1]} : vector<2x128xf32> to vector<2x32xf32>
    %439 = math.tanh %438 : vector<2x32xf32>
    %440 = vector.extract_strided_slice %437 {offsets = [0, 0], sizes = [2, 32], strides = [1, 1]} : vector<2x96xf32> to vector<2x32xf32>
    %441 = vector.extract_strided_slice %437 {offsets = [0, 32], sizes = [2, 32], strides = [1, 1]} : vector<2x96xf32> to vector<2x32xf32>
    %442 = vector.extract_strided_slice %437 {offsets = [0, 64], sizes = [2, 32], strides = [1, 1]} : vector<2x96xf32> to vector<2x32xf32>
    %443 = arith.mulf %441, %394 : vector<2x32xf32>
    %444 = arith.mulf %440, %439 : vector<2x32xf32>
    %445 = arith.addf %443, %444 : vector<2x32xf32>
    %446 = math.tanh %445 : vector<2x32xf32>
    %447 = arith.mulf %442, %446 : vector<2x32xf32>
    %448 = arith.index_cast %402 : i32 to index
    %c0_125 = arith.constant 0 : index
    %449 = vector.load %arg20[%448, %c0_125] : memref<16x32xf32, #tpu.memory_space<vmem>>, vector<2x32xf32>
    tpu.vector_store %arg20[%448, %c0_125], %431 {strides = array<i32>} : memref<16x32xf32, #tpu.memory_space<vmem>>, vector<2x32xf32>,
    %450 = arith.index_cast %405 : i32 to index
    %c0_126 = arith.constant 0 : index
    %451 = vector.load %arg21[%450, %c0_126] : memref<16x32xf32, #tpu.memory_space<vmem>>, vector<2x32xf32>
    tpu.vector_store %arg21[%450, %c0_126], %447 {strides = array<i32>} : memref<16x32xf32, #tpu.memory_space<vmem>>, vector<2x32xf32>,
    %c7_i32_127 = arith.constant 7 : i32
    %c2_i32_128 = arith.constant 2 : i32
    %452 = arith.muli %c7_i32_127, %c2_i32_128 : i32
    %453 = tpu.assume_multiple %452, 2 : i32
    %c7_i32_129 = arith.constant 7 : i32
    %454 = arith.subi %c7_i32_129, %c7_i32_127 : i32
    %c2_i32_130 = arith.constant 2 : i32
    %455 = arith.muli %454, %c2_i32_130 : i32
    %456 = tpu.assume_multiple %455, 2 : i32
    %457 = arith.index_cast %453 : i32 to index
    %c0_131 = arith.constant 0 : index
    %458 = vector.load %arg18[%457, %c0_131] : memref<16x128xf32, #tpu.memory_space<vmem>>, vector<2x128xf32>
    %459 = arith.truncf %431 : vector<2x32xf32> to vector<2x32xbf16>
    %cst_132 = arith.constant dense<0.000000e+00> : vector<2x128xf32>
    %460 = tpu.matmul %459, %93, %cst_132 {dimension_numbers = #tpu.dot_dimension_numbers<[1], [0], [0], [1], [0, 0, 1, 1], [], []>} : vector<2x32xbf16>, vector<32x128xbf16>, vector<2x128xf32> -> vector<2x128xf32>
    %461 = arith.addf %458, %460 : vector<2x128xf32>
    %462 = arith.index_cast %456 : i32 to index
    %c0_133 = arith.constant 0 : index
    %463 = vector.load %arg19[%462, %c0_133] : memref<16x128xf32, #tpu.memory_space<vmem>>, vector<2x128xf32>
    %464 = arith.truncf %447 : vector<2x32xf32> to vector<2x32xbf16>
    %cst_134 = arith.constant dense<0.000000e+00> : vector<2x128xf32>
    %465 = tpu.matmul %464, %94, %cst_134 {dimension_numbers = #tpu.dot_dimension_numbers<[1], [0], [0], [1], [0, 0, 1, 1], [], []>} : vector<2x32xbf16>, vector<32x128xbf16>, vector<2x128xf32> -> vector<2x128xf32>
    %466 = arith.addf %463, %465 : vector<2x128xf32>
    %467 = vector.extract_strided_slice %461 {offsets = [0, 0], sizes = [2, 96], strides = [1, 1]} : vector<2x128xf32> to vector<2x96xf32>
    %468 = arith.negf %467 : vector<2x96xf32>
    %469 = math.exp %468 : vector<2x96xf32>
    %cst_135 = arith.constant 1.000000e+00 : f32
    %470 = vector.broadcast %cst_135 : f32 to vector<2x96xf32>
    %471 = arith.addf %470, %469 : vector<2x96xf32>
    %472 = arith.divf %470, %471 : vector<2x96xf32>
    %473 = vector.extract_strided_slice %461 {offsets = [0, 96], sizes = [2, 32], strides = [1, 1]} : vector<2x128xf32> to vector<2x32xf32>
    %474 = math.tanh %473 : vector<2x32xf32>
    %475 = vector.extract_strided_slice %472 {offsets = [0, 0], sizes = [2, 32], strides = [1, 1]} : vector<2x96xf32> to vector<2x32xf32>
    %476 = vector.extract_strided_slice %472 {offsets = [0, 32], sizes = [2, 32], strides = [1, 1]} : vector<2x96xf32> to vector<2x32xf32>
    %477 = vector.extract_strided_slice %472 {offsets = [0, 64], sizes = [2, 32], strides = [1, 1]} : vector<2x96xf32> to vector<2x32xf32>
    %478 = arith.mulf %476, %429 : vector<2x32xf32>
    %479 = arith.mulf %475, %474 : vector<2x32xf32>
    %480 = arith.addf %478, %479 : vector<2x32xf32>
    %481 = math.tanh %480 : vector<2x32xf32>
    %482 = arith.mulf %477, %481 : vector<2x32xf32>
    %483 = vector.extract_strided_slice %466 {offsets = [0, 0], sizes = [2, 96], strides = [1, 1]} : vector<2x128xf32> to vector<2x96xf32>
    %484 = arith.negf %483 : vector<2x96xf32>
    %485 = math.exp %484 : vector<2x96xf32>
    %cst_136 = arith.constant 1.000000e+00 : f32
    %486 = vector.broadcast %cst_136 : f32 to vector<2x96xf32>
    %487 = arith.addf %486, %485 : vector<2x96xf32>
    %488 = arith.divf %486, %487 : vector<2x96xf32>
    %489 = vector.extract_strided_slice %466 {offsets = [0, 96], sizes = [2, 32], strides = [1, 1]} : vector<2x128xf32> to vector<2x32xf32>
    %490 = math.tanh %489 : vector<2x32xf32>
    %491 = vector.extract_strided_slice %488 {offsets = [0, 0], sizes = [2, 32], strides = [1, 1]} : vector<2x96xf32> to vector<2x32xf32>
    %492 = vector.extract_strided_slice %488 {offsets = [0, 32], sizes = [2, 32], strides = [1, 1]} : vector<2x96xf32> to vector<2x32xf32>
    %493 = vector.extract_strided_slice %488 {offsets = [0, 64], sizes = [2, 32], strides = [1, 1]} : vector<2x96xf32> to vector<2x32xf32>
    %494 = arith.mulf %492, %445 : vector<2x32xf32>
    %495 = arith.mulf %491, %490 : vector<2x32xf32>
    %496 = arith.addf %494, %495 : vector<2x32xf32>
    %497 = math.tanh %496 : vector<2x32xf32>
    %498 = arith.mulf %493, %497 : vector<2x32xf32>
    %499 = arith.index_cast %453 : i32 to index
    %c0_137 = arith.constant 0 : index
    %500 = vector.load %arg20[%499, %c0_137] : memref<16x32xf32, #tpu.memory_space<vmem>>, vector<2x32xf32>
    tpu.vector_store %arg20[%499, %c0_137], %482 {strides = array<i32>} : memref<16x32xf32, #tpu.memory_space<vmem>>, vector<2x32xf32>,
    %501 = arith.index_cast %456 : i32 to index
    %c0_138 = arith.constant 0 : index
    %502 = vector.load %arg21[%501, %c0_138] : memref<16x32xf32, #tpu.memory_space<vmem>>, vector<2x32xf32>
    tpu.vector_store %arg21[%501, %c0_138], %498 {strides = array<i32>} : memref<16x32xf32, #tpu.memory_space<vmem>>, vector<2x32xf32>,
    %c8_i32 = arith.constant 8 : i32
    %c0_139 = arith.constant 0 : index
    %c0_140 = arith.constant 0 : index
    %503 = vector.load %arg20[%c0_139, %c0_140] : memref<16x32xf32, #tpu.memory_space<vmem>>, vector<16x32xf32>
    %504 = arith.truncf %503 : vector<16x32xf32> to vector<16x32xbf16>
    %c0_141 = arith.constant 0 : index
    %c0_142 = arith.constant 0 : index
    %505 = vector.load %arg14[%c0_141, %c0_142] : memref<32x128xbf16, #tpu.memory_space<vmem>>, vector<32x128xbf16>
    %cst_143 = arith.constant dense<0.000000e+00> : vector<16x128xf32>
    %506 = tpu.matmul %504, %505, %cst_143 {dimension_numbers = #tpu.dot_dimension_numbers<[1], [0], [0], [1], [0, 0, 1, 1], [], []>} : vector<16x32xbf16>, vector<32x128xbf16>, vector<16x128xf32> -> vector<16x128xf32>
    %c0_144 = arith.constant 0 : index
    %c0_145 = arith.constant 0 : index
    %507 = vector.load %arg21[%c0_144, %c0_145] : memref<16x32xf32, #tpu.memory_space<vmem>>, vector<16x32xf32>
    %508 = arith.truncf %507 : vector<16x32xf32> to vector<16x32xbf16>
    %c0_146 = arith.constant 0 : index
    %c0_147 = arith.constant 0 : index
    %509 = vector.load %arg15[%c0_146, %c0_147] : memref<32x128xbf16, #tpu.memory_space<vmem>>, vector<32x128xbf16>
    %cst_148 = arith.constant dense<0.000000e+00> : vector<16x128xf32>
    %510 = tpu.matmul %508, %509, %cst_148 {dimension_numbers = #tpu.dot_dimension_numbers<[1], [0], [0], [1], [0, 0, 1, 1], [], []>} : vector<16x32xbf16>, vector<32x128xbf16>, vector<16x128xf32> -> vector<16x128xf32>
    %511 = arith.addf %506, %510 : vector<16x128xf32>
    %c0_149 = arith.constant 0 : index
    %c0_150 = arith.constant 0 : index
    %512 = vector.load %arg16[%c0_149, %c0_150] : memref<1x128xf32, #tpu.memory_space<vmem>>, vector<1x128xf32>
    %513 = vector.broadcast %512 : vector<1x128xf32> to vector<16x128xf32>
    %514 = arith.addf %511, %513 : vector<16x128xf32>
    %c0_151 = arith.constant 0 : index
    %c0_152 = arith.constant 0 : index
    %515 = vector.load %arg17[%c0_151, %c0_152] : memref<16x128xf32, #tpu.memory_space<vmem>>, vector<16x128xf32>
    tpu.vector_store %arg17[%c0_151, %c0_152], %514 {strides = array<i32>} : memref<16x128xf32, #tpu.memory_space<vmem>>, vector<16x128xf32>,
    return
  }
  func.func @transform_0(%arg0: i32) -> (i32, i32) {
    %c0_i32 = arith.constant 0 : i32
    %c0_i32_0 = arith.constant 0 : i32
    return %arg0, %c0_i32 : i32, i32
  }
  func.func @transform_1(%arg0: i32) -> (i32, i32) {
    %c0_i32 = arith.constant 0 : i32
    %c0_i32_0 = arith.constant 0 : i32
    return %arg0, %c0_i32 : i32, i32
  }
  func.func @transform_2(%arg0: i32) -> (i32, i32) {
    %c0_i32 = arith.constant 0 : i32
    %c0_i32_0 = arith.constant 0 : i32
    return %arg0, %c0_i32 : i32, i32
  }
  func.func @transform_3(%arg0: i32) -> (i32, i32) {
    %c0_i32 = arith.constant 0 : i32
    %c0_i32_0 = arith.constant 0 : i32
    %c0_i32_1 = arith.constant 0 : i32
    return %c0_i32, %c0_i32_0 : i32, i32
  }
  func.func @transform_4(%arg0: i32) -> (i32, i32) {
    %c0_i32 = arith.constant 0 : i32
    %c0_i32_0 = arith.constant 0 : i32
    %c0_i32_1 = arith.constant 0 : i32
    return %c0_i32, %c0_i32_0 : i32, i32
  }
  func.func @transform_5(%arg0: i32) -> (i32, i32) {
    %c0_i32 = arith.constant 0 : i32
    %c0_i32_0 = arith.constant 0 : i32
    %c0_i32_1 = arith.constant 0 : i32
    return %c0_i32, %c0_i32_0 : i32, i32
  }
  func.func @transform_6(%arg0: i32) -> (i32, i32) {
    %c0_i32 = arith.constant 0 : i32
    %c0_i32_0 = arith.constant 0 : i32
    %c0_i32_1 = arith.constant 0 : i32
    return %c0_i32, %c0_i32_0 : i32, i32
  }
  func.func @transform_7(%arg0: i32) -> (i32, i32) {
    %c0_i32 = arith.constant 0 : i32
    %c0_i32_0 = arith.constant 0 : i32
    %c0_i32_1 = arith.constant 0 : i32
    return %c0_i32, %c0_i32_0 : i32, i32
  }
  func.func @transform_8(%arg0: i32) -> (i32, i32) {
    %c0_i32 = arith.constant 0 : i32
    %c0_i32_0 = arith.constant 0 : i32
    %c0_i32_1 = arith.constant 0 : i32
    return %c0_i32, %c0_i32_0 : i32, i32
  }
  func.func @transform_9(%arg0: i32) -> (i32, i32) {
    %c0_i32 = arith.constant 0 : i32
    %c0_i32_0 = arith.constant 0 : i32
    %c0_i32_1 = arith.constant 0 : i32
    return %c0_i32, %c0_i32_0 : i32, i32
  }
  func.func @transform_10(%arg0: i32) -> (i32, i32) {
    %c0_i32 = arith.constant 0 : i32
    %c0_i32_0 = arith.constant 0 : i32
    %c0_i32_1 = arith.constant 0 : i32
    return %c0_i32, %c0_i32_0 : i32, i32
  }
  func.func @transform_11(%arg0: i32) -> (i32, i32) {
    %c0_i32 = arith.constant 0 : i32
    %c0_i32_0 = arith.constant 0 : i32
    %c0_i32_1 = arith.constant 0 : i32
    return %c0_i32, %c0_i32_0 : i32, i32
  }
  func.func @transform_12(%arg0: i32) -> (i32, i32) {
    %c0_i32 = arith.constant 0 : i32
    %c0_i32_0 = arith.constant 0 : i32
    %c0_i32_1 = arith.constant 0 : i32
    return %c0_i32, %c0_i32_0 : i32, i32
  }
  func.func @transform_13(%arg0: i32) -> (i32, i32) {
    %c0_i32 = arith.constant 0 : i32
    %c0_i32_0 = arith.constant 0 : i32
    %c0_i32_1 = arith.constant 0 : i32
    return %c0_i32, %c0_i32_0 : i32, i32
  }
  func.func @transform_14(%arg0: i32) -> (i32, i32) {
    %c0_i32 = arith.constant 0 : i32
    %c0_i32_0 = arith.constant 0 : i32
    %c0_i32_1 = arith.constant 0 : i32
    return %c0_i32, %c0_i32_0 : i32, i32
  }
  func.func @transform_15(%arg0: i32) -> (i32, i32) {
    %c0_i32 = arith.constant 0 : i32
    %c0_i32_0 = arith.constant 0 : i32
    %c0_i32_1 = arith.constant 0 : i32
    return %c0_i32, %c0_i32_0 : i32, i32
  }
  func.func @transform_16(%arg0: i32) -> (i32, i32) {
    %c0_i32 = arith.constant 0 : i32
    %c0_i32_0 = arith.constant 0 : i32
    return %arg0, %c0_i32 : i32, i32
  }
}

</mosaic_0001>

<llo_original>
// kernel: tpu_custom_call.1
$region0: #{tpu_custom_call.1}
  #allocation0 [shape = 'u32[]', space=smem, size = 0x4, offset = 0x4, fixed_abs, tag = 'smem constant byte address 0x4 - core index']
  #allocation1 [shape = 'u32[72,128]{1,0:T(1,128)}', space=vmem, size = 0x9000, scoped, tag = 'internal scratch']
  #allocation2 [shape = 'f32[16,128]{1,0:T(8,128)}', space=vmem, size = 0x2000, scoped, tag = 'scratch operand']
  #allocation3 [shape = 'f32[16,128]{1,0:T(8,128)}', space=vmem, size = 0x2000, scoped, tag = 'scratch operand']
  #allocation4 [shape = 'f32[16,32]{1,0:T(8,128)}', space=vmem, size = 0x2000, scoped, tag = 'scratch operand']
  #allocation5 [shape = 'f32[16,32]{1,0:T(8,128)}', space=vmem, size = 0x2000, scoped, tag = 'scratch operand']
  %s0 = inlined_call_operand.hbm [shape: bf16[16,32], index: 0, kind: input, shape index: {}]
  %s1 = inlined_call_operand.vmem [shape: f32[16,4], index: 1, kind: input, shape index: {}]
  %s2 = inlined_call_operand.vmem [shape: f32[16,1], index: 2, kind: input, shape index: {}]
  %s3 = inlined_call_operand.vmem [shape: bf16[32,32], index: 3, kind: input, shape index: {}]
  %s4 = inlined_call_operand.hbm [shape: bf16[4,32], index: 4, kind: input, shape index: {}]
  %s5 = inlined_call_operand.vmem [shape: bf16[32,32], index: 5, kind: input, shape index: {}]
  %s6 = inlined_call_operand.hbm [shape: bf16[32,32], index: 6, kind: input, shape index: {}]
  %s7 = inlined_call_operand.hbm [shape: bf16[32,128], index: 7, kind: input, shape index: {}]
  %s8 = inlined_call_operand.hbm [shape: bf16[32,128], index: 8, kind: input, shape index: {}]
  %s9 = inlined_call_operand.hbm [shape: f32[1,128], index: 9, kind: input, shape index: {}]
  %s10 = inlined_call_operand.hbm [shape: f32[1,128], index: 10, kind: input, shape index: {}]
  %s11 = inlined_call_operand.hbm [shape: bf16[32,128], index: 11, kind: input, shape index: {}]
  %s12 = inlined_call_operand.hbm [shape: bf16[32,128], index: 12, kind: input, shape index: {}]
  %s13 = inlined_call_operand.vmem [shape: bf16[32,128], index: 13, kind: input, shape index: {}]
  %s14 = inlined_call_operand.hbm [shape: bf16[32,128], index: 14, kind: input, shape index: {}]
  %s15 = inlined_call_operand.vmem [shape: f32[1,128], index: 15, kind: input, shape index: {}]
  %s16 = inlined_call_operand.hbm [shape: f32[16,128], index: 16, kind: output, shape index: {}]
  %s17 = sld [smem:[#allocation0]]
  $region114: #{tpu_custom_call.1} parent=0
    _
  %s19 = ssub.s32 1, %s17
  %s20 = scalar_select 0, %s19, %s17
  $region1: #{tpu_custom_call.1} parent=0
    #allocation6 [shape = 'u8[4096]{0}', space=vmem, size = 0x1000, scoped, tag = 'input window, operand 0, single buffered']
    #allocation7 [shape = 's32[1]{0}', space=sflag, size = 0x4, scoped, tag = 'scoped memory for tpu_custom_call.1']
    #allocation8 [shape = 's32[1]{0}', space=sflag, size = 0x4, scoped, tag = 'scoped memory for tpu_custom_call.1']
    #allocation9 [shape = 'u8[1024]{0}', space=vmem, size = 0x400, scoped, tag = 'input window, operand 4, single buffered']
    #allocation10 [shape = 's32[1]{0}', space=sflag, size = 0x4, scoped, tag = 'scoped memory for tpu_custom_call.1']
    #allocation11 [shape = 'u8[8192]{0}', space=vmem, size = 0x2000, scoped, tag = 'input window, operand 6, single buffered']
    #allocation12 [shape = 'u8[8192]{0}', space=vmem, size = 0x2000, scoped, tag = 'input window, operand 7, single buffered']
    #allocation13 [shape = 's32[1]{0}', space=sflag, size = 0x4, scoped, tag = 'scoped memory for tpu_custom_call.1']
    #allocation14 [shape = 'u8[8192]{0}', space=vmem, size = 0x2000, scoped, tag = 'input window, operand 8, single buffered']
    #allocation15 [shape = 'u8[512]{0}', space=vmem, size = 0x400, scoped, tag = 'input window, operand 9, single buffered']
    #allocation16 [shape = 's32[1]{0}', space=sflag, size = 0x4, scoped, tag = 'scoped memory for tpu_custom_call.1']
    #allocation17 [shape = 'u8[512]{0}', space=vmem, size = 0x400, scoped, tag = 'input window, operand 10, single buffered']
    #allocation18 [shape = 'u8[8192]{0}', space=vmem, size = 0x2000, scoped, tag = 'input window, operand 11, single buffered']
    #allocation19 [shape = 's32[1]{0}', space=sflag, size = 0x4, scoped, tag = 'scoped memory for tpu_custom_call.1']
    #allocation20 [shape = 'u8[8192]{0}', space=vmem, size = 0x2000, scoped, tag = 'input window, operand 12, single buffered']
    #allocation21 [shape = 'u8[8192]{0}', space=vmem, size = 0x2000, scoped, tag = 'input window, operand 14, single buffered']
    #allocation22 [shape = 's32[1]{0}', space=sflag, size = 0x4, scoped, tag = 'scoped memory for tpu_custom_call.1']
    #allocation23 [shape = 'u8[8192]{0}', space=vmem, size = 0x2000, scoped, tag = 'output window, operand 0, single buffered']
    %21 = vsyncpa [#allocation7], 0
    %22 = vsyncpa [#allocation10], 0
    %23 = vsyncpa [#allocation13], 0
    %24 = vsyncpa [#allocation16], 0
    %25 = vsyncpa [#allocation19], 0
    %26 = vsyncpa [#allocation22], 0
    %27 = vsyncpa [#allocation8], 0
    // Predicated region
    $region2: #{tpu_custom_call.1} parent=1 // pred_check
      _
    $region3: #{tpu_custom_call.1} parent=1 // pred_check_branch
      %29 = sbr.rel (0) target = $region5
    $region4: #{tpu_custom_call.1} parent=1 // pred_region
      %31 = vsyncadd [#allocation7], 0
      %s32 = sshll.u32 %s0, 4
      %s33 = int_to_ptr.hbm [resolvable:$true] %s32
      %s34 = sshll.u32 [#allocation6], 4
      %s35 = int_to_ptr.vmem [resolvable:$true] %s34
      %40 = dma.hbm_to_vmem [thread:$0]  %s33, 128, %s35, [#allocation7], 64, 64, 4
    $region5: #{tpu_custom_call.1} parent=1 // pred_fallthru
      _
    // Predicated region
    $region6: #{tpu_custom_call.1} parent=1 // pred_check
      _
    $region7: #{tpu_custom_call.1} parent=1 // pred_check_branch
      %42 = sbr.rel (0) target = $region9
    $region8: #{tpu_custom_call.1} parent=1 // pred_region
      _
    $region9: #{tpu_custom_call.1} parent=1 // pred_fallthru
      _
    // Predicated region
    $region10: #{tpu_custom_call.1} parent=1 // pred_check
      _
    $region11: #{tpu_custom_call.1} parent=1 // pred_check_branch
      %44 = sbr.rel (0) target = $region13
    $region12: #{tpu_custom_call.1} parent=1 // pred_region
      _
    $region13: #{tpu_custom_call.1} parent=1 // pred_fallthru
      _
    // Predicated region
    $region14: #{tpu_custom_call.1} parent=1 // pred_check
      _
    $region15: #{tpu_custom_call.1} parent=1 // pred_check_branch
      %46 = sbr.rel (0) target = $region17
    $region16: #{tpu_custom_call.1} parent=1 // pred_region
      _
    $region17: #{tpu_custom_call.1} parent=1 // pred_fallthru
      _
    // Predicated region
    $region18: #{tpu_custom_call.1} parent=1 // pred_check
      _
    $region19: #{tpu_custom_call.1} parent=1 // pred_check_branch
      %48 = sbr.rel (0) target = $region21
    $region20: #{tpu_custom_call.1} parent=1 // pred_region
      %50 = vsyncadd [#allocation10], 0
      %s52 = sshll.u32 %s4, 4
      %s53 = int_to_ptr.hbm [resolvable:$true] %s52
      %s54 = sshll.u32 [#allocation9], 4
      %s55 = int_to_ptr.vmem [resolvable:$true] %s54
      %57 = dma.hbm_to_vmem [thread:$0]  %s53, 32, %s55, [#allocation10]
    $region21: #{tpu_custom_call.1} parent=1 // pred_fallthru
      _
    // Predicated region
    $region22: #{tpu_custom_call.1} parent=1 // pred_check
      _
    $region23: #{tpu_custom_call.1} parent=1 // pred_check_branch
      %59 = sbr.rel (0) target = $region25
    $region24: #{tpu_custom_call.1} parent=1 // pred_region
      _
    $region25: #{tpu_custom_call.1} parent=1 // pred_fallthru
      _
    // Predicated region
    $region26: #{tpu_custom_call.1} parent=1 // pred_check
      _
    $region27: #{tpu_custom_call.1} parent=1 // pred_check_branch
      %61 = sbr.rel (0) target = $region29
    $region28: #{tpu_custom_call.1} parent=1 // pred_region
      %63 = vsyncadd [#allocation10], 0
      %s64 = sshll.u32 %s6, 4
      %s65 = int_to_ptr.hbm [resolvable:$true] %s64
      %s66 = sshll.u32 [#allocation11], 4
      %s67 = int_to_ptr.vmem [resolvable:$true] %s66
      %72 = dma.hbm_to_vmem [thread:$0]  %s65, 256, %s67, [#allocation10], 64, 64, 4
    $region29: #{tpu_custom_call.1} parent=1 // pred_fallthru
      _
    // Predicated region
    $region30: #{tpu_custom_call.1} parent=1 // pred_check
      _
    $region31: #{tpu_custom_call.1} parent=1 // pred_check_branch
      %74 = sbr.rel (0) target = $region33
    $region32: #{tpu_custom_call.1} parent=1 // pred_region
      %76 = vsyncadd [#allocation13], 0
      %s77 = sshll.u32 %s7, 4
      %s78 = int_to_ptr.hbm [resolvable:$true] %s77
      %s79 = sshll.u32 [#allocation12], 4
      %s80 = int_to_ptr.vmem [resolvable:$true] %s79
      %85 = dma.hbm_to_vmem [thread:$0]  %s78, 256, %s80, [#allocation13], 64, 64, 4
    $region33: #{tpu_custom_call.1} parent=1 // pred_fallthru
      _
    // Predicated region
    $region34: #{tpu_custom_call.1} parent=1 // pred_check
      _
    $region35: #{tpu_custom_call.1} parent=1 // pred_check_branch
      %87 = sbr.rel (0) target = $region37
    $region36: #{tpu_custom_call.1} parent=1 // pred_region
      %89 = vsyncadd [#allocation13], 0
      %s90 = sshll.u32 %s8, 4
      %s91 = int_to_ptr.hbm [resolvable:$true] %s90
      %s92 = sshll.u32 [#allocation14], 4
      %s93 = int_to_ptr.vmem [resolvable:$true] %s92
      %98 = dma.hbm_to_vmem [thread:$0]  %s91, 256, %s93, [#allocation13], 64, 64, 4
    $region37: #{tpu_custom_call.1} parent=1 // pred_fallthru
      _
    // Predicated region
    $region38: #{tpu_custom_call.1} parent=1 // pred_check
      _
    $region39: #{tpu_custom_call.1} parent=1 // pred_check_branch
      %100 = sbr.rel (0) target = $region41
    $region40: #{tpu_custom_call.1} parent=1 // pred_region
      %102 = vsyncadd [#allocation16], 0
      %s104 = sshll.u32 %s9, 4
      %s105 = int_to_ptr.hbm [resolvable:$true] %s104
      %s106 = sshll.u32 [#allocation15], 4
      %s107 = int_to_ptr.vmem [resolvable:$true] %s106
      %109 = dma.hbm_to_vmem [thread:$0]  %s105, 16, %s107, [#allocation16]
    $region41: #{tpu_custom_call.1} parent=1 // pred_fallthru
      _
    // Predicated region
    $region42: #{tpu_custom_call.1} parent=1 // pred_check
      _
    $region43: #{tpu_custom_call.1} parent=1 // pred_check_branch
      %111 = sbr.rel (0) target = $region45
    $region44: #{tpu_custom_call.1} parent=1 // pred_region
      %113 = vsyncadd [#allocation16], 0
      %s115 = sshll.u32 %s10, 4
      %s116 = int_to_ptr.hbm [resolvable:$true] %s115
      %s117 = sshll.u32 [#allocation17], 4
      %s118 = int_to_ptr.vmem [resolvable:$true] %s117
      %120 = dma.hbm_to_vmem [thread:$0]  %s116, 16, %s118, [#allocation16]
    $region45: #{tpu_custom_call.1} parent=1 // pred_fallthru
      _
    // Predicated region
    $region46: #{tpu_custom_call.1} parent=1 // pred_check
      _
    $region47: #{tpu_custom_call.1} parent=1 // pred_check_branch
      %122 = sbr.rel (0) target = $region49
    $region48: #{tpu_custom_call.1} parent=1 // pred_region
      %124 = vsyncadd [#allocation19], 0
      %s125 = sshll.u32 %s11, 4
      %s126 = int_to_ptr.hbm [resolvable:$true] %s125
      %s127 = sshll.u32 [#allocation18], 4
      %s128 = int_to_ptr.vmem [resolvable:$true] %s127
      %133 = dma.hbm_to_vmem [thread:$0]  %s126, 256, %s128, [#allocation19], 64, 64, 4
    $region49: #{tpu_custom_call.1} parent=1 // pred_fallthru
      _
    // Predicated region
    $region50: #{tpu_custom_call.1} parent=1 // pred_check
      _
    $region51: #{tpu_custom_call.1} parent=1 // pred_check_branch
      %135 = sbr.rel (0) target = $region53
    $region52: #{tpu_custom_call.1} parent=1 // pred_region
      %137 = vsyncadd [#allocation19], 0
      %s138 = sshll.u32 %s12, 4
      %s139 = int_to_ptr.hbm [resolvable:$true] %s138
      %s140 = sshll.u32 [#allocation20], 4
      %s141 = int_to_ptr.vmem [resolvable:$true] %s140
      %146 = dma.hbm_to_vmem [thread:$0]  %s139, 256, %s141, [#allocation19], 64, 64, 4
    $region53: #{tpu_custom_call.1} parent=1 // pred_fallthru
      _
    // Predicated region
    $region54: #{tpu_custom_call.1} parent=1 // pred_check
      _
    $region55: #{tpu_custom_call.1} parent=1 // pred_check_branch
      %148 = sbr.rel (0) target = $region57
    $region56: #{tpu_custom_call.1} parent=1 // pred_region
      _
    $region57: #{tpu_custom_call.1} parent=1 // pred_fallthru
      _
    // Predicated region
    $region58: #{tpu_custom_call.1} parent=1 // pred_check
      _
    $region59: #{tpu_custom_call.1} parent=1 // pred_check_branch
      %150 = sbr.rel (0) target = $region61
    $region60: #{tpu_custom_call.1} parent=1 // pred_region
      %152 = vsyncadd [#allocation22], 0
      %s153 = sshll.u32 %s14, 4
      %s154 = int_to_ptr.hbm [resolvable:$true] %s153
      %s155 = sshll.u32 [#allocation21], 4
      %s156 = int_to_ptr.vmem [resolvable:$true] %s155
      %161 = dma.hbm_to_vmem [thread:$0]  %s154, 256, %s156, [#allocation22], 64, 64, 4
    $region61: #{tpu_custom_call.1} parent=1 // pred_fallthru
      _
    // Predicated region
    $region62: #{tpu_custom_call.1} parent=1 // pred_check
      _
    $region63: #{tpu_custom_call.1} parent=1 // pred_check_branch
      %163 = sbr.rel (0) target = $region65
    $region64: #{tpu_custom_call.1} parent=1 // pred_region
      _
    $region65: #{tpu_custom_call.1} parent=1 // pred_fallthru
      _
    // Predicated region
    $region66: #{tpu_custom_call.1} parent=1 // pred_check
      _
    $region67: #{tpu_custom_call.1} parent=1 // pred_check_branch
      %165 = sbr.rel (0) target = $region69
    $region68: #{tpu_custom_call.1} parent=1 // pred_region
      %167 = dma.done [#allocation7], 128
    $region69: #{tpu_custom_call.1} parent=1 // pred_fallthru
      _
    // Predicated region
    $region70: #{tpu_custom_call.1} parent=1 // pred_check
      _
    $region71: #{tpu_custom_call.1} parent=1 // pred_check_branch
      %169 = sbr.rel (0) target = $region73
    $region72: #{tpu_custom_call.1} parent=1 // pred_region
      %171 = dma.done [#allocation10], 32
    $region73: #{tpu_custom_call.1} parent=1 // pred_fallthru
      _
    // Predicated region
    $region74: #{tpu_custom_call.1} parent=1 // pred_check
      _
    $region75: #{tpu_custom_call.1} parent=1 // pred_check_branch
      %173 = sbr.rel (0) target = $region77
    $region76: #{tpu_custom_call.1} parent=1 // pred_region
      %175 = dma.done [#allocation10], 256
    $region77: #{tpu_custom_call.1} parent=1 // pred_fallthru
      _
    // Predicated region
    $region78: #{tpu_custom_call.1} parent=1 // pred_check
      _
    $region79: #{tpu_custom_call.1} parent=1 // pred_check_branch
      %177 = sbr.rel (0) target = $region81
    $region80: #{tpu_custom_call.1} parent=1 // pred_region
      %179 = dma.done [#allocation13], 256
    $region81: #{tpu_custom_call.1} parent=1 // pred_fallthru
      _
    // Predicated region
    $region82: #{tpu_custom_call.1} parent=1 // pred_check
      _
    $region83: #{tpu_custom_call.1} parent=1 // pred_check_branch
      %181 = sbr.rel (0) target = $region85
    $region84: #{tpu_custom_call.1} parent=1 // pred_region
      %183 = dma.done [#allocation13], 256
    $region85: #{tpu_custom_call.1} parent=1 // pred_fallthru
      _
    // Predicated region
    $region86: #{tpu_custom_call.1} parent=1 // pred_check
      _
    $region87: #{tpu_custom_call.1} parent=1 // pred_check_branch
      %185 = sbr.rel (0) target = $region89
    $region88: #{tpu_custom_call.1} parent=1 // pred_region
      %187 = dma.done [#allocation16], 16
    $region89: #{tpu_custom_call.1} parent=1 // pred_fallthru
      _
    // Predicated region
    $region90: #{tpu_custom_call.1} parent=1 // pred_check
      _
    $region91: #{tpu_custom_call.1} parent=1 // pred_check_branch
      %189 = sbr.rel (0) target = $region93
    $region92: #{tpu_custom_call.1} parent=1 // pred_region
      %191 = dma.done [#allocation16], 16
    $region93: #{tpu_custom_call.1} parent=1 // pred_fallthru
      _
    // Predicated region
    $region94: #{tpu_custom_call.1} parent=1 // pred_check
      _
    $region95: #{tpu_custom_call.1} parent=1 // pred_check_branch
      %193 = sbr.rel (0) target = $region97
    $region96: #{tpu_custom_call.1} parent=1 // pred_region
      %195 = dma.done [#allocation19], 256
    $region97: #{tpu_custom_call.1} parent=1 // pred_fallthru
      _
    // Predicated region
    $region98: #{tpu_custom_call.1} parent=1 // pred_check
      _
    $region99: #{tpu_custom_call.1} parent=1 // pred_check_branch
      %197 = sbr.rel (0) target = $region101
    $region100: #{tpu_custom_call.1} parent=1 // pred_region
      %199 = dma.done [#allocation19], 256
    $region101: #{tpu_custom_call.1} parent=1 // pred_fallthru
      _
    // Predicated region
    $region102: #{tpu_custom_call.1} parent=1 // pred_check
      _
    $region103: #{tpu_custom_call.1} parent=1 // pred_check_branch
      %201 = sbr.rel (0) target = $region105
    $region104: #{tpu_custom_call.1} parent=1 // pred_region
      %203 = dma.done [#allocation22], 256
    $region105: #{tpu_custom_call.1} parent=1 // pred_fallthru
      _
    %v205 = vld [vmem:[#allocation6] sm:$0xf]
    %v206 = vld [vmem:[#allocation6 + $0x4] sm:$0xf]
    %v207 = vld [vmem:[%s3] sm:$0xf]
    %v208 = vld [vmem:[%s3 + $0x4] sm:$0xf]
    %v209 = vld [vmem:[%s3 + $0x8] sm:$0xf]
    %v210 = vld [vmem:[%s3 + $0xc] sm:$0xf]
    %v213 = vunpack.c.l.b16 %v205
    %v214 = vunpack.c.l.b16 %v206
    %v215 = vpack.c.b16 %v214, %v213
    %v220 = vunpack.c.l.b16 %v207
    %v221 = vunpack.c.l.b16 %v208
    %v222 = vunpack.c.l.b16 %v209
    %v223 = vunpack.c.l.b16 %v210
    %v224 = vpack.c.b16 %v221, %v220
    %v225 = vpack.c.b16 %v223, %v222
    %vm228 = vcmask 261120
    %v230 = vsel %vm228, %v215, 0
    %232 = vmatpush.bf16.msra.mxu0 0
    %233 = vmatpush.bf16.msra.mxu0 0
    %234 = vmatpush.bf16.msra.mxu0 0
    %235 = vmatpush.bf16.msra.mxu0 0
    %236 = vmatpush.bf16.msra.mxu0 0
    %237 = vmatpush.bf16.msra.mxu0 0
    %238 = vmatpush.bf16.msra.mxu0 %v225
    %239 = vmatpush.bf16.msra.mxu0 %v224
    %240 = vmatmul.bf16.gmra.mxu0 %v230
    %v241 = vpop.f32.mrf.mxu0
    %v242 = vadd.f32 0.0, %v241
    %v243 = vpop.f32.mrf.mxu0
    %v244 = vadd.f32 0.0, %v243
    %245 = vdwg.mxu0
    %v246 = vld [vmem:[%s1] sm:$0xff]
    %v247 = vld [vmem:[%s1 + $0x8] sm:$0xff]
    %vm248 = vcmask 31744
    %v249 = vsel %vm248, %v246, -inf
    %250 = vmax.xlane.f32.xlu0 %v249
    %v251 = vpop.xlane.xlu0 %250
    %v252 = vsel %vm248, %v247, -inf
    %253 = vmax.xlane.f32.xlu0 %v252
    %v254 = vpop.xlane.xlu0 %253
    %v255 = vsub.f32 %v246, %v251
    %v256 = vsub.f32 %v247, %v254
    %v257 = vmul.f32 %v255, 1.442695
    %v258 = vpow.pop %v257
    %v259 = vmul.f32 %v256, 1.442695
    %v260 = vpow.pop %v259
    %v261 = vsel %vm248, %v258, 0.0
    %262 = vadd.xlane.f32.xlu0 %v261
    %v263 = vpop.xlane.xlu0 %262
    %v264 = vsel %vm248, %v260, 0.0
    %265 = vadd.xlane.f32.xlu0 %v264
    %v266 = vpop.xlane.xlu0 %265
    %v267 = vrcp.pop %v263
    %v268 = vmul.f32 %v263, %v267
    %v269 = vsub.f32 1.0, %v268
    %v270 = vmul.f32 %v267, %v269
    %v271 = vadd.f32 %v267, %v270
    %vm272 = vweird.f32 %v263
    %vm273 = vweird.f32 %v267
    %vm274 = vmor %vm272, %vm273
    %v275 = vsel %vm274, %v267, %v271
    %v276 = vand.u32 2147483647, %v263
    %vm277 = vcmp.eq.f32.partialorder %v276, 8.507059e+37
    %v278 = vand.u32 %v263, 2147483648
    %v279 = vor.u32 1.1754944e-38, %v278
    %v280 = vsel %vm277, %v279, %v275
    %v281 = vmul.f32 %v258, %v280
    %v282 = vrcp.pop %v266
    %v283 = vmul.f32 %v266, %v282
    %v284 = vsub.f32 1.0, %v283
    %v285 = vmul.f32 %v282, %v284
    %v286 = vadd.f32 %v282, %v285
    %vm287 = vweird.f32 %v266
    %vm288 = vweird.f32 %v282
    %vm289 = vmor %vm287, %vm288
    %v290 = vsel %vm289, %v282, %v286
    %v291 = vand.u32 2147483647, %v266
    %vm292 = vcmp.eq.f32.partialorder %v291, 8.507059e+37
    %v293 = vand.u32 %v266, 2147483648
    %v294 = vor.u32 1.1754944e-38, %v293
    %v295 = vsel %vm292, %v294, %v290
    %v296 = vmul.f32 %v260, %v295
    %v297 = vpack.c.bf16 %v296, %v281
    %v298 = vld [vmem:[#allocation9] sm:$0x3]
    %v300 = vsel %vm248, %v297, 0
    %vm302 = vcmask 1041408
    %v304 = vsel %vm302, %v298, 0
    %306 = vmatpush.bf16.msra.mxu0 0
    %307 = vmatpush.bf16.msra.mxu0 0
    %308 = vmatpush.bf16.msra.mxu0 0
    %309 = vmatpush.bf16.msra.mxu0 0
    %310 = vmatpush.bf16.msra.mxu0 0
    %311 = vmatpush.bf16.msra.mxu0 0
    %312 = vmatpush.bf16.msra.mxu0 0
    %313 = vmatpush.bf16.msra.mxu0 %v304
    %314 = vmatmul.bf16.gmra.mxu0 %v300
    %v315 = vpop.f32.mrf.mxu0
    %v316 = vadd.f32 0.0, %v315
    %v317 = vpop.f32.mrf.mxu0
    %v318 = vadd.f32 0.0, %v317
    %319 = vdwg.mxu0
    %v320 = vmul.f32 %v242, %v316
    %v321 = vmul.f32 %v244, %v318
    %v322 = vsel %vm228, %v320, 0.0
    %323 = vadd.xlane.f32.xlu0 %v322
    %v324 = vpop.xlane.xlu0 %323
    %v325 = vsel %vm228, %v321, 0.0
    %326 = vadd.xlane.f32.xlu0 %v325
    %v327 = vpop.xlane.xlu0 %326
    %v328 = vld [vmem:[%s2] sm:$0xff]
    %v329 = vld [vmem:[%s2 + $0x8] sm:$0xff]
    %vm330 = vcmp.ge.f32.partialorder %v328, 0.5
    %vm331 = vcmp.ge.f32.partialorder %v329, 0.5
    %v332 = vsel %vm330, %v324, -1e+30
    %v333 = vsel %vm331, %v327, -1e+30
    %v334 = vlaneseq
    %v335 = vshrl.u32 %v334, 7
    %v336 = vadd.s32 %v335, 8
    %v337 = vcvt.s32.f32 %v335
    %v338 = vcvt.s32.f32 %v336
    %v339 = vlaneseq
    %v340 = vand.u32 %v339, 127
    %v341 = vcvt.s32.f32 %v340
    %v342 = vadd.f32 %v337, 0.5
    %v343 = vadd.f32 %v338, 0.5
    %v344 = vmul.f32 %v342, 0.5
    %v345 = vmul.f32 %v343, 0.5
    %v346 = vfloor.f32 %v344
    %v347 = vfloor.f32 %v345
    %v348 = vmul.f32 %v346, 2.0
    %v349 = vmul.f32 %v347, 2.0
    %v350 = vsub.f32 %v337, %v348
    %v351 = vsub.f32 %v338, %v349
    %vm352 = vcmp.eq.f32.partialorder %v350, %v341
    %vm353 = vcmp.eq.f32.partialorder %v351, %v341
    %v354 = vsel %vm352, 1, 0
    %v355 = vsel %vm353, 1, 0
    %v356 = vcvt.s32.f32 %v354
    %v357 = vcvt.s32.f32 %v355
    %359 = vset.pattern.permute.xlu0 0
    %360 = vperm.xlu0 %359, %v332
    %v361 = vpop.permute.xlu0 %360
    %364 = vset.pattern.permute.xlu0 0
    %365 = vperm.xlu0 %364, %v333
    %v366 = vpop.permute.xlu0 %365
    %v368 = vsel %vm352, %v361, -1e+30
    %v369 = vsel %vm353, %v366, -1e+30
    %vm370 = vcmask 15360
    %v371 = vsel %vm370, %v368, -inf
    %v372 = vsel %vm370, %v369, -inf
    %v373 = vmax.f32 %v371, %v372
    %v374 = vrot.slane %v373, 4
    %v375 = vmax.f32 %v373, %v374
    %v376 = vrot.slane %v375, 2
    %v377 = vmax.f32 %v375, %v376
    %v378 = vrot.slane %v377, 1
    %v379 = vmax.f32 %v377, %v378
    %v380 = vsel %vm352, %v379, -1e+30
    %v381 = vsel %vm353, %v379, -1e+30
    %v382 = vsel %vm370, %v380, -inf
    %383 = vmax.xlane.f32.xlu0 %v382
    %v384 = vpop.xlane.xlu0 %383
    %v385 = vsel %vm370, %v381, -inf
    %386 = vmax.xlane.f32.xlu0 %v385
    %v387 = vpop.xlane.xlu0 %386
    %v388 = vsub.f32 %v332, %v384
    %v389 = vsub.f32 %v333, %v387
    %v390 = vmul.f32 %v388, 1.442695
    %v391 = vpow.pop %v390
    %v392 = vmul.f32 %v389, 1.442695
    %v393 = vpow.pop %v392
    %v394 = vsel %vm330, %v391, 0.0
    %v395 = vsel %vm331, %v393, 0.0
    %397 = vset.pattern.permute.xlu0 0
    %398 = vperm.xlu0 %397, %v394
    %v399 = vpop.permute.xlu0 %398
    %402 = vset.pattern.permute.xlu0 0
    %403 = vperm.xlu0 %402, %v395
    %v404 = vpop.permute.xlu0 %403
    %v406 = vmul.f32 %v356, %v399
    %v407 = vmul.f32 %v357, %v404
    %v408 = vsel %vm370, %v406, 0.0
    %v409 = vsel %vm370, %v407, 0.0
    %v410 = vadd.f32 %v408, %v409
    %v411 = vrot.slane %v410, 4
    %v412 = vadd.f32 %v410, %v411
    %v413 = vrot.slane %v412, 2
    %v414 = vadd.f32 %v412, %v413
    %v415 = vrot.slane %v414, 1
    %v416 = vadd.f32 %v414, %v415
    %v417 = vmul.f32 %v356, %v416
    %v418 = vmul.f32 %v357, %v416
    %v419 = vsel %vm370, %v417, 0.0
    %420 = vadd.xlane.f32.xlu0 %v419
    %v421 = vpop.xlane.xlu0 %420
    %v422 = vsel %vm370, %v418, 0.0
    %423 = vadd.xlane.f32.xlu0 %v422
    %v424 = vpop.xlane.xlu0 %423
    %v425 = vmax.f32 %v421, 1e-30
    %v426 = vmax.f32 %v424, 1e-30
    %v427 = vrcp.pop %v425
    %v428 = vrcp.pop %v426
    %v429 = vmul.f32 %v394, %v427
    %v430 = vmul.f32 %v395, %v428
    %432 = vset.pattern.permute.xlu0 0
    %433 = vperm.xlu0 %432, %v429
    %v434 = vpop.permute.xlu0 %433
    %437 = vset.pattern.permute.xlu0 0
    %438 = vperm.xlu0 %437, %v430
    %v439 = vpop.permute.xlu0 %438
    %v441 = vmul.f32 %v434, %v316
    %v442 = vmul.f32 %v439, %v318
    %v443 = vpack.c.bf16 %v442, %v441
    %v444 = vld [vmem:[%s5] sm:$0xf]
    %v445 = vld [vmem:[%s5 + $0x4] sm:$0xf]
    %v446 = vld [vmem:[%s5 + $0x8] sm:$0xf]
    %v447 = vld [vmem:[%s5 + $0xc] sm:$0xf]
    %v448 = vpack.c.bf16 %v244, %v242
    %v449 = vld [vmem:[#allocation11] sm:$0xf]
    %v450 = vld [vmem:[#allocation11 + $0x4] sm:$0xf]
    %v451 = vld [vmem:[#allocation11 + $0x8] sm:$0xf]
    %v452 = vld [vmem:[#allocation11 + $0xc] sm:$0xf]
    %v457 = vunpack.c.l.b16 %v449
    %v458 = vunpack.c.l.b16 %v450
    %v459 = vunpack.c.l.b16 %v451
    %v460 = vunpack.c.l.b16 %v452
    %v461 = vpack.c.b16 %v458, %v457
    %v462 = vpack.c.b16 %v460, %v459
    %v466 = vsel %vm228, %v448, 0
    %468 = vmatpush.bf16.msra.mxu0 0
    %469 = vmatpush.bf16.msra.mxu0 0
    %470 = vmatpush.bf16.msra.mxu0 0
    %471 = vmatpush.bf16.msra.mxu0 0
    %472 = vmatpush.bf16.msra.mxu0 0
    %473 = vmatpush.bf16.msra.mxu0 0
    %474 = vmatpush.bf16.msra.mxu0 %v462
    %475 = vmatpush.bf16.msra.mxu0 %v461
    %476 = vmatmul.bf16.gmra.mxu0 %v466
    %v477 = vpop.f32.mrf.mxu0
    %v478 = vadd.f32 0.0, %v477
    %v479 = vpop.f32.mrf.mxu0
    %v480 = vadd.f32 0.0, %v479
    %481 = vdwg.mxu0
    %v486 = vunpack.c.l.b16 %v444
    %v487 = vunpack.c.l.b16 %v445
    %v488 = vunpack.c.l.b16 %v446
    %v489 = vunpack.c.l.b16 %v447
    %v490 = vpack.c.b16 %v487, %v486
    %v491 = vpack.c.b16 %v489, %v488
    %v495 = vsel %vm228, %v443, 0
    %497 = vmatpush.bf16.msra.mxu0 0
    %498 = vmatpush.bf16.msra.mxu0 0
    %499 = vmatpush.bf16.msra.mxu0 0
    %500 = vmatpush.bf16.msra.mxu0 0
    %501 = vmatpush.bf16.msra.mxu0 0
    %502 = vmatpush.bf16.msra.mxu0 0
    %503 = vmatpush.bf16.msra.mxu0 %v491
    %504 = vmatpush.bf16.msra.mxu0 %v490
    %505 = vmatmul.bf16.gmra.mxu0 %v495
    %v506 = vpop.f32.mrf.mxu0
    %v507 = vadd.f32 %v478, %v506
    %v508 = vpop.f32.mrf.mxu0
    %v509 = vadd.f32 %v480, %v508
    %510 = vdwg.mxu0
    %v511 = vtanh.pop %v507
    %v512 = vtanh.pop %v509
    %v513 = vpack.c.bf16 %v512, %v511
    %v514 = vld [vmem:[#allocation12] sm:$0xf]
    %v515 = vld [vmem:[#allocation12 + $0x4] sm:$0xf]
    %v516 = vld [vmem:[#allocation12 + $0x8] sm:$0xf]
    %v517 = vld [vmem:[#allocation12 + $0xc] sm:$0xf]
    %v518 = vld [vmem:[#allocation15] sm:$0x1]
    %v520 = vperm.slane %v518, 0
    %v526 = vunpack.c.l.b16 %v514
    %v527 = vunpack.c.l.b16 %v515
    %v528 = vunpack.c.l.b16 %v516
    %v529 = vunpack.c.l.b16 %v517
    %v530 = vpack.c.b16 %v527, %v526
    %v531 = vpack.c.b16 %v529, %v528
    %v535 = vsel %vm228, %v513, 0
    %537 = vmatpush.bf16.msra.mxu0 0
    %538 = vmatpush.bf16.msra.mxu0 0
    %539 = vmatpush.bf16.msra.mxu0 0
    %540 = vmatpush.bf16.msra.mxu0 0
    %541 = vmatpush.bf16.msra.mxu0 0
    %542 = vmatpush.bf16.msra.mxu0 0
    %543 = vmatpush.bf16.msra.mxu0 %v531
    %544 = vmatpush.bf16.msra.mxu0 %v530
    %545 = vmatmul.bf16.gmra.mxu0 %v535
    %v546 = vpop.f32.mrf.mxu0
    %v547 = vadd.f32 %v520, %v546
    %v548 = vpop.f32.mrf.mxu0
    %v549 = vadd.f32 %v520, %v548
    %550 = vdwg.mxu0
    %551 = vst [vmem:[#allocation2] sm:$0xff] %v547
    %552 = vst [vmem:[#allocation2 + $0x8] sm:$0xff] %v549
    %v553 = vld [vmem:[#allocation14] sm:$0xf]
    %v554 = vld [vmem:[#allocation14 + $0x4] sm:$0xf]
    %v555 = vld [vmem:[#allocation14 + $0x8] sm:$0xf]
    %v556 = vld [vmem:[#allocation14 + $0xc] sm:$0xf]
    %v557 = vld [vmem:[#allocation17] sm:$0x1]
    %v559 = vperm.slane %v557, 0
    %v565 = vunpack.c.l.b16 %v553
    %v566 = vunpack.c.l.b16 %v554
    %v567 = vunpack.c.l.b16 %v555
    %v568 = vunpack.c.l.b16 %v556
    %v569 = vpack.c.b16 %v566, %v565
    %v570 = vpack.c.b16 %v568, %v567
    %573 = vmatpush.bf16.msra.mxu0 0
    %574 = vmatpush.bf16.msra.mxu0 0
    %575 = vmatpush.bf16.msra.mxu0 0
    %576 = vmatpush.bf16.msra.mxu0 0
    %577 = vmatpush.bf16.msra.mxu0 0
    %578 = vmatpush.bf16.msra.mxu0 0
    %579 = vmatpush.bf16.msra.mxu0 %v570
    %580 = vmatpush.bf16.msra.mxu0 %v569
    %581 = vmatmul.bf16.gmra.mxu0 %v535
    %v582 = vpop.f32.mrf.mxu0
    %v583 = vadd.f32 %v559, %v582
    %v584 = vpop.f32.mrf.mxu0
    %v585 = vadd.f32 %v559, %v584
    %586 = vdwg.mxu0
    %587 = vst [vmem:[#allocation3] sm:$0xff] %v583
    %588 = vst [vmem:[#allocation3 + $0x8] sm:$0xff] %v585
    %v589 = vld [vmem:[#allocation18] sm:$0xf]
    %v590 = vld [vmem:[#allocation18 + $0x4] sm:$0xf]
    %v591 = vld [vmem:[#allocation18 + $0x8] sm:$0xf]
    %v592 = vld [vmem:[#allocation18 + $0xc] sm:$0xf]
    %v593 = vld [vmem:[#allocation20] sm:$0xf]
    %v594 = vld [vmem:[#allocation20 + $0x4] sm:$0xf]
    %v595 = vld [vmem:[#allocation20 + $0x8] sm:$0xf]
    %v596 = vld [vmem:[#allocation20 + $0xc] sm:$0xf]
    %v597 = vld [vmem:[#allocation2] sm:$0x3]
    %v598 = vpack.c.bf16 %v316, %v316
    %v603 = vunpack.c.l.b16 %v589
    %v604 = vunpack.c.l.b16 %v590
    %v605 = vunpack.c.l.b16 %v591
    %v606 = vunpack.c.l.b16 %v592
    %v607 = vpack.c.b16 %v604, %v603
    %v608 = vpack.c.b16 %v606, %v605
    %v612 = vsel %vm228, %v598, 0
    %614 = vmatpush.bf16.msra.mxu0 0
    %615 = vmatpush.bf16.msra.mxu0 0
    %616 = vmatpush.bf16.msra.mxu0 0
    %617 = vmatpush.bf16.msra.mxu0 0
    %618 = vmatpush.bf16.msra.mxu0 0
    %619 = vmatpush.bf16.msra.mxu0 0
    %620 = vmatpush.bf16.msra.mxu0 %v608
    %621 = vmatpush.bf16.msra.mxu0 %v607
    %622 = vmatmul.bf16.gmra.mxu0 %v612
    %v623 = vpop.f32.mrf.mxu0
    %v624 = vadd.f32 0.0, %v623
    %v625 = vpop.f32.mrf.mxu0
    %626 = vdwg.mxu0
    %v627 = vadd.f32 %v597, %v624
    %s628 = scalar_lea.vmem [#allocation3], 14
    %v629 = vld [vmem:[%s628] sm:$0x3]
    %v634 = vunpack.c.l.b16 %v593
    %v635 = vunpack.c.l.b16 %v594
    %v636 = vunpack.c.l.b16 %v595
    %v637 = vunpack.c.l.b16 %v596
    %v638 = vpack.c.b16 %v635, %v634
    %v639 = vpack.c.b16 %v637, %v636
    %642 = vmatpush.bf16.msra.mxu0 0
    %643 = vmatpush.bf16.msra.mxu0 0
    %644 = vmatpush.bf16.msra.mxu0 0
    %645 = vmatpush.bf16.msra.mxu0 0
    %646 = vmatpush.bf16.msra.mxu0 0
    %647 = vmatpush.bf16.msra.mxu0 0
    %648 = vmatpush.bf16.msra.mxu0 %v639
    %649 = vmatpush.bf16.msra.mxu0 %v638
    %650 = vmatmul.bf16.gmra.mxu0 %v612
    %v651 = vpop.f32.mrf.mxu0
    %v652 = vadd.f32 0.0, %v651
    %v653 = vpop.f32.mrf.mxu0
    %654 = vdwg.mxu0
    %v655 = vadd.f32 %v629, %v652
    %v656 = vxor.u32 %v627, 2147483648
    %v657 = vmul.f32 %v656, 1.442695
    %v658 = vpow.pop %v657
    %v659 = vadd.f32 %v658, 1.0
    %v660 = vrcp.pop %v659
    %v661 = vmul.f32 %v659, %v660
    %v662 = vsub.f32 1.0, %v661
    %v663 = vmul.f32 %v660, %v662
    %v664 = vadd.f32 %v660, %v663
    %vm665 = vweird.f32 %v659
    %vm666 = vweird.f32 %v660
    %vm667 = vmor %vm665, %vm666
    %v668 = vsel %vm667, %v660, %v664
    %v669 = vand.u32 2147483647, %v659
    %vm670 = vcmp.eq.f32.partialorder %v669, 8.507059e+37
    %v671 = vand.u32 %v659, 2147483648
    %v672 = vor.u32 1.1754944e-38, %v671
    %v673 = vsel %vm670, %v672, %v668
    %v674 = vmul.f32 1.0, %v673
    %v675 = vtanh.pop %v627
    %677 = vrot.lane.b32.xlu0 %v316, 32
    %v678 = vpop.permute.xlu0 %677
    %v680 = vmul.f32 %v674, %v678
    %682 = vrot.lane.b32.xlu0 %v675, 32
    %v683 = vpop.permute.xlu0 %682
    %v685 = vmul.f32 %v674, %v683
    %687 = vrot.lane.b32.xlu0 %v685, 32
    %v688 = vpop.permute.xlu0 %687
    %v690 = vadd.f32 %v680, %v688
    %v691 = vtanh.pop %v690
    %693 = vrot.lane.b32.xlu0 %v691, 32
    %v694 = vpop.permute.xlu0 %693
    %v696 = vmul.f32 %v674, %v694
    %v697 = vxor.u32 %v655, 2147483648
    %v698 = vmul.f32 %v697, 1.442695
    %v699 = vpow.pop %v698
    %v700 = vadd.f32 %v699, 1.0
    %v701 = vrcp.pop %v700
    %v702 = vmul.f32 %v700, %v701
    %v703 = vsub.f32 1.0, %v702
    %v704 = vmul.f32 %v701, %v703
    %v705 = vadd.f32 %v701, %v704
    %vm706 = vweird.f32 %v700
    %vm707 = vweird.f32 %v701
    %vm708 = vmor %vm706, %vm707
    %v709 = vsel %vm708, %v701, %v705
    %v710 = vand.u32 2147483647, %v700
    %vm711 = vcmp.eq.f32.partialorder %v710, 8.507059e+37
    %v712 = vand.u32 %v700, 2147483648
    %v713 = vor.u32 1.1754944e-38, %v712
    %v714 = vsel %vm711, %v713, %v709
    %v715 = vmul.f32 1.0, %v714
    %v716 = vtanh.pop %v655
    %v717 = vmul.f32 %v715, %v678
    %719 = vrot.lane.b32.xlu0 %v716, 32
    %v720 = vpop.permute.xlu0 %719
    %v722 = vmul.f32 %v715, %v720
    %724 = vrot.lane.b32.xlu0 %v722, 32
    %v725 = vpop.permute.xlu0 %724
    %v727 = vadd.f32 %v717, %v725
    %v728 = vtanh.pop %v727
    %730 = vrot.lane.b32.xlu0 %v728, 32
    %v731 = vpop.permute.xlu0 %730
    %v733 = vmul.f32 %v715, %v731
    %735 = vrot.lane.b32.xlu0 %v696, 64
    %v736 = vpop.permute.xlu0 %735
    %vm738 = vcmask 254976
    %739 = vst.msk [vmem:[#allocation4] sm:$0x3] %vm738, %v736
    %741 = vrot.lane.b32.xlu0 %v733, 64
    %v742 = vpop.permute.xlu0 %741
    %s744 = scalar_lea.vmem [#allocation5], 14
    %745 = vst.msk [vmem:[%s744] sm:$0x3] %vm738, %v742
    %s746 = scalar_lea.vmem [#allocation2], 2
    %v747 = vld [vmem:[%s746] sm:$0x3]
    %v748 = vpack.c.bf16 %v696, %v696
    %750 = vrot.lane.b32.xlu0 %v748, 64
    %v751 = vpop.permute.xlu0 %750
    %v753 = vsel %vm228, %v751, 0
    %755 = vmatpush.bf16.msra.mxu0 0
    %756 = vmatpush.bf16.msra.mxu0 0
    %757 = vmatpush.bf16.msra.mxu0 0
    %758 = vmatpush.bf16.msra.mxu0 0
    %759 = vmatpush.bf16.msra.mxu0 0
    %760 = vmatpush.bf16.msra.mxu0 0
    %761 = vmatpush.bf16.msra.mxu0 %v608
    %762 = vmatpush.bf16.msra.mxu0 %v607
    %763 = vmatmul.bf16.gmra.mxu0 %v753
    %v764 = vpop.f32.mrf.mxu0
    %v765 = vadd.f32 0.0, %v764
    %v766 = vpop.f32.mrf.mxu0
    %767 = vdwg.mxu0
    %v768 = vadd.f32 %v747, %v765
    %s769 = scalar_lea.vmem [#allocation3], 12
    %v770 = vld [vmem:[%s769] sm:$0x3]
    %v771 = vpack.c.bf16 %v733, %v733
    %773 = vrot.lane.b32.xlu0 %v771, 64
    %v774 = vpop.permute.xlu0 %773
    %v776 = vsel %vm228, %v774, 0
    %778 = vmatpush.bf16.msra.mxu0 0
    %779 = vmatpush.bf16.msra.mxu0 0
    %780 = vmatpush.bf16.msra.mxu0 0
    %781 = vmatpush.bf16.msra.mxu0 0
    %782 = vmatpush.bf16.msra.mxu0 0
    %783 = vmatpush.bf16.msra.mxu0 0
    %784 = vmatpush.bf16.msra.mxu0 %v639
    %785 = vmatpush.bf16.msra.mxu0 %v638
    %786 = vmatmul.bf16.gmra.mxu0 %v776
    %v787 = vpop.f32.mrf.mxu0
    %v788 = vadd.f32 0.0, %v787
    %v789 = vpop.f32.mrf.mxu0
    %790 = vdwg.mxu0
    %v791 = vadd.f32 %v770, %v788
    %v792 = vxor.u32 %v768, 2147483648
    %v793 = vmul.f32 %v792, 1.442695
    %v794 = vpow.pop %v793
    %v795 = vadd.f32 %v794, 1.0
    %v796 = vrcp.pop %v795
    %v797 = vmul.f32 %v795, %v796
    %v798 = vsub.f32 1.0, %v797
    %v799 = vmul.f32 %v796, %v798
    %v800 = vadd.f32 %v796, %v799
    %vm801 = vweird.f32 %v795
    %vm802 = vweird.f32 %v796
    %vm803 = vmor %vm801, %vm802
    %v804 = vsel %vm803, %v796, %v800
    %v805 = vand.u32 2147483647, %v795
    %vm806 = vcmp.eq.f32.partialorder %v805, 8.507059e+37
    %v807 = vand.u32 %v795, 2147483648
    %v808 = vor.u32 1.1754944e-38, %v807
    %v809 = vsel %vm806, %v808, %v804
    %v810 = vmul.f32 1.0, %v809
    %v811 = vtanh.pop %v768
    %v812 = vmul.f32 %v810, %v690
    %814 = vrot.lane.b32.xlu0 %v811, 32
    %v815 = vpop.permute.xlu0 %814
    %v817 = vmul.f32 %v810, %v815
    %819 = vrot.lane.b32.xlu0 %v817, 32
    %v820 = vpop.permute.xlu0 %819
    %v822 = vadd.f32 %v812, %v820
    %v823 = vtanh.pop %v822
    %825 = vrot.lane.b32.xlu0 %v823, 32
    %v826 = vpop.permute.xlu0 %825
    %v828 = vmul.f32 %v810, %v826
    %v829 = vxor.u32 %v791, 2147483648
    %v830 = vmul.f32 %v829, 1.442695
    %v831 = vpow.pop %v830
    %v832 = vadd.f32 %v831, 1.0
    %v833 = vrcp.pop %v832
    %v834 = vmul.f32 %v832, %v833
    %v835 = vsub.f32 1.0, %v834
    %v836 = vmul.f32 %v833, %v835
    %v837 = vadd.f32 %v833, %v836
    %vm838 = vweird.f32 %v832
    %vm839 = vweird.f32 %v833
    %vm840 = vmor %vm838, %vm839
    %v841 = vsel %vm840, %v833, %v837
    %v842 = vand.u32 2147483647, %v832
    %vm843 = vcmp.eq.f32.partialorder %v842, 8.507059e+37
    %v844 = vand.u32 %v832, 2147483648
    %v845 = vor.u32 1.1754944e-38, %v844
    %v846 = vsel %vm843, %v845, %v841
    %v847 = vmul.f32 1.0, %v846
    %v848 = vtanh.pop %v791
    %v849 = vmul.f32 %v847, %v727
    %851 = vrot.lane.b32.xlu0 %v848, 32
    %v852 = vpop.permute.xlu0 %851
    %v854 = vmul.f32 %v847, %v852
    %856 = vrot.lane.b32.xlu0 %v854, 32
    %v857 = vpop.permute.xlu0 %856
    %v859 = vadd.f32 %v849, %v857
    %v860 = vtanh.pop %v859
    %862 = vrot.lane.b32.xlu0 %v860, 32
    %v863 = vpop.permute.xlu0 %862
    %v865 = vmul.f32 %v847, %v863
    %867 = vrot.lane.b32.xlu0 %v828, 64
    %v868 = vpop.permute.xlu0 %867
    %s870 = scalar_lea.vmem [#allocation4], 2
    %871 = vst.msk [vmem:[%s870] sm:$0x3] %vm738, %v868
    %873 = vrot.lane.b32.xlu0 %v865, 64
    %v874 = vpop.permute.xlu0 %873
    %s876 = scalar_lea.vmem [#allocation5], 12
    %877 = vst.msk [vmem:[%s876] sm:$0x3] %vm738, %v874
    %s878 = scalar_lea.vmem [#allocation2], 4
    %v879 = vld [vmem:[%s878] sm:$0x3]
    %v880 = vpack.c.bf16 %v828, %v828
    %882 = vrot.lane.b32.xlu0 %v880, 64
    %v883 = vpop.permute.xlu0 %882
    %v885 = vsel %vm228, %v883, 0
    %887 = vmatpush.bf16.msra.mxu0 0
    %888 = vmatpush.bf16.msra.mxu0 0
    %889 = vmatpush.bf16.msra.mxu0 0
    %890 = vmatpush.bf16.msra.mxu0 0
    %891 = vmatpush.bf16.msra.mxu0 0
    %892 = vmatpush.bf16.msra.mxu0 0
    %893 = vmatpush.bf16.msra.mxu0 %v608
    %894 = vmatpush.bf16.msra.mxu0 %v607
    %895 = vmatmul.bf16.gmra.mxu0 %v885
    %v896 = vpop.f32.mrf.mxu0
    %v897 = vadd.f32 0.0, %v896
    %v898 = vpop.f32.mrf.mxu0
    %899 = vdwg.mxu0
    %v900 = vadd.f32 %v879, %v897
    %s901 = scalar_lea.vmem [#allocation3], 10
    %v902 = vld [vmem:[%s901] sm:$0x3]
    %v903 = vpack.c.bf16 %v865, %v865
    %905 = vrot.lane.b32.xlu0 %v903, 64
    %v906 = vpop.permute.xlu0 %905
    %v908 = vsel %vm228, %v906, 0
    %910 = vmatpush.bf16.msra.mxu0 0
    %911 = vmatpush.bf16.msra.mxu0 0
    %912 = vmatpush.bf16.msra.mxu0 0
    %913 = vmatpush.bf16.msra.mxu0 0
    %914 = vmatpush.bf16.msra.mxu0 0
    %915 = vmatpush.bf16.msra.mxu0 0
    %916 = vmatpush.bf16.msra.mxu0 %v639
    %917 = vmatpush.bf16.msra.mxu0 %v638
    %918 = vmatmul.bf16.gmra.mxu0 %v908
    %v919 = vpop.f32.mrf.mxu0
    %v920 = vadd.f32 0.0, %v919
    %v921 = vpop.f32.mrf.mxu0
    %922 = vdwg.mxu0
    %v923 = vadd.f32 %v902, %v920
    %v924 = vxor.u32 %v900, 2147483648
    %v925 = vmul.f32 %v924, 1.442695
    %v926 = vpow.pop %v925
    %v927 = vadd.f32 %v926, 1.0
    %v928 = vrcp.pop %v927
    %v929 = vmul.f32 %v927, %v928
    %v930 = vsub.f32 1.0, %v929
    %v931 = vmul.f32 %v928, %v930
    %v932 = vadd.f32 %v928, %v931
    %vm933 = vweird.f32 %v927
    %vm934 = vweird.f32 %v928
    %vm935 = vmor %vm933, %vm934
    %v936 = vsel %vm935, %v928, %v932
    %v937 = vand.u32 2147483647, %v927
    %vm938 = vcmp.eq.f32.partialorder %v937, 8.507059e+37
    %v939 = vand.u32 %v927, 2147483648
    %v940 = vor.u32 1.1754944e-38, %v939
    %v941 = vsel %vm938, %v940, %v936
    %v942 = vmul.f32 1.0, %v941
    %v943 = vtanh.pop %v900
    %v944 = vmul.f32 %v942, %v822
    %946 = vrot.lane.b32.xlu0 %v943, 32
    %v947 = vpop.permute.xlu0 %946
    %v949 = vmul.f32 %v942, %v947
    %951 = vrot.lane.b32.xlu0 %v949, 32
    %v952 = vpop.permute.xlu0 %951
    %v954 = vadd.f32 %v944, %v952
    %v955 = vtanh.pop %v954
    %957 = vrot.lane.b32.xlu0 %v955, 32
    %v958 = vpop.permute.xlu0 %957
    %v960 = vmul.f32 %v942, %v958
    %v961 = vxor.u32 %v923, 2147483648
    %v962 = vmul.f32 %v961, 1.442695
    %v963 = vpow.pop %v962
    %v964 = vadd.f32 %v963, 1.0
    %v965 = vrcp.pop %v964
    %v966 = vmul.f32 %v964, %v965
    %v967 = vsub.f32 1.0, %v966
    %v968 = vmul.f32 %v965, %v967
    %v969 = vadd.f32 %v965, %v968
    %vm970 = vweird.f32 %v964
    %vm971 = vweird.f32 %v965
    %vm972 = vmor %vm970, %vm971
    %v973 = vsel %vm972, %v965, %v969
    %v974 = vand.u32 2147483647, %v964
    %vm975 = vcmp.eq.f32.partialorder %v974, 8.507059e+37
    %v976 = vand.u32 %v964, 2147483648
    %v977 = vor.u32 1.1754944e-38, %v976
    %v978 = vsel %vm975, %v977, %v973
    %v979 = vmul.f32 1.0, %v978
    %v980 = vtanh.pop %v923
    %v981 = vmul.f32 %v979, %v859
    %983 = vrot.lane.b32.xlu0 %v980, 32
    %v984 = vpop.permute.xlu0 %983
    %v986 = vmul.f32 %v979, %v984
    %988 = vrot.lane.b32.xlu0 %v986, 32
    %v989 = vpop.permute.xlu0 %988
    %v991 = vadd.f32 %v981, %v989
    %v992 = vtanh.pop %v991
    %994 = vrot.lane.b32.xlu0 %v992, 32
    %v995 = vpop.permute.xlu0 %994
    %v997 = vmul.f32 %v979, %v995
    %999 = vrot.lane.b32.xlu0 %v960, 64
    %v1000 = vpop.permute.xlu0 %999
    %s1002 = scalar_lea.vmem [#allocation4], 4
    %1003 = vst.msk [vmem:[%s1002] sm:$0x3] %vm738, %v1000
    %1005 = vrot.lane.b32.xlu0 %v997, 64
    %v1006 = vpop.permute.xlu0 %1005
    %s1008 = scalar_lea.vmem [#allocation5], 10
    %1009 = vst.msk [vmem:[%s1008] sm:$0x3] %vm738, %v1006
    %s1010 = scalar_lea.vmem [#allocation2], 6
    %v1011 = vld [vmem:[%s1010] sm:$0x3]
    %v1012 = vpack.c.bf16 %v960, %v960
    %1014 = vrot.lane.b32.xlu0 %v1012, 64
    %v1015 = vpop.permute.xlu0 %1014
    %v1017 = vsel %vm228, %v1015, 0
    %1019 = vmatpush.bf16.msra.mxu0 0
    %1020 = vmatpush.bf16.msra.mxu0 0
    %1021 = vmatpush.bf16.msra.mxu0 0
    %1022 = vmatpush.bf16.msra.mxu0 0
    %1023 = vmatpush.bf16.msra.mxu0 0
    %1024 = vmatpush.bf16.msra.mxu0 0
    %1025 = vmatpush.bf16.msra.mxu0 %v608
    %1026 = vmatpush.bf16.msra.mxu0 %v607
    %1027 = vmatmul.bf16.gmra.mxu0 %v1017
    %v1028 = vpop.f32.mrf.mxu0
    %v1029 = vadd.f32 0.0, %v1028
    %v1030 = vpop.f32.mrf.mxu0
    %1031 = vdwg.mxu0
    %v1032 = vadd.f32 %v1011, %v1029
    %s1033 = scalar_lea.vmem [#allocation3], 8
    %v1034 = vld [vmem:[%s1033] sm:$0x3]
    %v1035 = vpack.c.bf16 %v997, %v997
    %1037 = vrot.lane.b32.xlu0 %v1035, 64
    %v1038 = vpop.permute.xlu0 %1037
    %v1040 = vsel %vm228, %v1038, 0
    %1042 = vmatpush.bf16.msra.mxu0 0
    %1043 = vmatpush.bf16.msra.mxu0 0
    %1044 = vmatpush.bf16.msra.mxu0 0
    %1045 = vmatpush.bf16.msra.mxu0 0
    %1046 = vmatpush.bf16.msra.mxu0 0
    %1047 = vmatpush.bf16.msra.mxu0 0
    %1048 = vmatpush.bf16.msra.mxu0 %v639
    %1049 = vmatpush.bf16.msra.mxu0 %v638
    %1050 = vmatmul.bf16.gmra.mxu0 %v1040
    %v1051 = vpop.f32.mrf.mxu0
    %v1052 = vadd.f32 0.0, %v1051
    %v1053 = vpop.f32.mrf.mxu0
    %1054 = vdwg.mxu0
    %v1055 = vadd.f32 %v1034, %v1052
    %v1056 = vxor.u32 %v1032, 2147483648
    %v1057 = vmul.f32 %v1056, 1.442695
    %v1058 = vpow.pop %v1057
    %v1059 = vadd.f32 %v1058, 1.0
    %v1060 = vrcp.pop %v1059
    %v1061 = vmul.f32 %v1059, %v1060
    %v1062 = vsub.f32 1.0, %v1061
    %v1063 = vmul.f32 %v1060, %v1062
    %v1064 = vadd.f32 %v1060, %v1063
    %vm1065 = vweird.f32 %v1059
    %vm1066 = vweird.f32 %v1060
    %vm1067 = vmor %vm1065, %vm1066
    %v1068 = vsel %vm1067, %v1060, %v1064
    %v1069 = vand.u32 2147483647, %v1059
    %vm1070 = vcmp.eq.f32.partialorder %v1069, 8.507059e+37
    %v1071 = vand.u32 %v1059, 2147483648
    %v1072 = vor.u32 1.1754944e-38, %v1071
    %v1073 = vsel %vm1070, %v1072, %v1068
    %v1074 = vmul.f32 1.0, %v1073
    %v1075 = vtanh.pop %v1032
    %v1076 = vmul.f32 %v1074, %v954
    %1078 = vrot.lane.b32.xlu0 %v1075, 32
    %v1079 = vpop.permute.xlu0 %1078
    %v1081 = vmul.f32 %v1074, %v1079
    %1083 = vrot.lane.b32.xlu0 %v1081, 32
    %v1084 = vpop.permute.xlu0 %1083
    %v1086 = vadd.f32 %v1076, %v1084
    %v1087 = vtanh.pop %v1086
    %1089 = vrot.lane.b32.xlu0 %v1087, 32
    %v1090 = vpop.permute.xlu0 %1089
    %v1092 = vmul.f32 %v1074, %v1090
    %v1093 = vxor.u32 %v1055, 2147483648
    %v1094 = vmul.f32 %v1093, 1.442695
    %v1095 = vpow.pop %v1094
    %v1096 = vadd.f32 %v1095, 1.0
    %v1097 = vrcp.pop %v1096
    %v1098 = vmul.f32 %v1096, %v1097
    %v1099 = vsub.f32 1.0, %v1098
    %v1100 = vmul.f32 %v1097, %v1099
    %v1101 = vadd.f32 %v1097, %v1100
    %vm1102 = vweird.f32 %v1096
    %vm1103 = vweird.f32 %v1097
    %vm1104 = vmor %vm1102, %vm1103
    %v1105 = vsel %vm1104, %v1097, %v1101
    %v1106 = vand.u32 2147483647, %v1096
    %vm1107 = vcmp.eq.f32.partialorder %v1106, 8.507059e+37
    %v1108 = vand.u32 %v1096, 2147483648
    %v1109 = vor.u32 1.1754944e-38, %v1108
    %v1110 = vsel %vm1107, %v1109, %v1105
    %v1111 = vmul.f32 1.0, %v1110
    %v1112 = vtanh.pop %v1055
    %v1113 = vmul.f32 %v1111, %v991
    %1115 = vrot.lane.b32.xlu0 %v1112, 32
    %v1116 = vpop.permute.xlu0 %1115
    %v1118 = vmul.f32 %v1111, %v1116
    %1120 = vrot.lane.b32.xlu0 %v1118, 32
    %v1121 = vpop.permute.xlu0 %1120
    %v1123 = vadd.f32 %v1113, %v1121
    %v1124 = vtanh.pop %v1123
    %1126 = vrot.lane.b32.xlu0 %v1124, 32
    %v1127 = vpop.permute.xlu0 %1126
    %v1129 = vmul.f32 %v1111, %v1127
    %1131 = vrot.lane.b32.xlu0 %v1092, 64
    %v1132 = vpop.permute.xlu0 %1131
    %s1134 = scalar_lea.vmem [#allocation4], 6
    %1135 = vst.msk [vmem:[%s1134] sm:$0x3] %vm738, %v1132
    %1137 = vrot.lane.b32.xlu0 %v1129, 64
    %v1138 = vpop.permute.xlu0 %1137
    %s1140 = scalar_lea.vmem [#allocation5], 8
    %1141 = vst.msk [vmem:[%s1140] sm:$0x3] %vm738, %v1138
    %s1142 = scalar_lea.vmem [#allocation2], 8
    %v1143 = vld [vmem:[%s1142] sm:$0x3]
    %v1144 = vpack.c.bf16 %v1092, %v1092
    %1146 = vrot.lane.b32.xlu0 %v1144, 64
    %v1147 = vpop.permute.xlu0 %1146
    %v1149 = vsel %vm228, %v1147, 0
    %1151 = vmatpush.bf16.msra.mxu0 0
    %1152 = vmatpush.bf16.msra.mxu0 0
    %1153 = vmatpush.bf16.msra.mxu0 0
    %1154 = vmatpush.bf16.msra.mxu0 0
    %1155 = vmatpush.bf16.msra.mxu0 0
    %1156 = vmatpush.bf16.msra.mxu0 0
    %1157 = vmatpush.bf16.msra.mxu0 %v608
    %1158 = vmatpush.bf16.msra.mxu0 %v607
    %1159 = vmatmul.bf16.gmra.mxu0 %v1149
    %v1160 = vpop.f32.mrf.mxu0
    %v1161 = vadd.f32 0.0, %v1160
    %v1162 = vpop.f32.mrf.mxu0
    %1163 = vdwg.mxu0
    %v1164 = vadd.f32 %v1143, %v1161
    %s1165 = scalar_lea.vmem [#allocation3], 6
    %v1166 = vld [vmem:[%s1165] sm:$0x3]
    %v1167 = vpack.c.bf16 %v1129, %v1129
    %1169 = vrot.lane.b32.xlu0 %v1167, 64
    %v1170 = vpop.permute.xlu0 %1169
    %v1172 = vsel %vm228, %v1170, 0
    %1174 = vmatpush.bf16.msra.mxu0 0
    %1175 = vmatpush.bf16.msra.mxu0 0
    %1176 = vmatpush.bf16.msra.mxu0 0
    %1177 = vmatpush.bf16.msra.mxu0 0
    %1178 = vmatpush.bf16.msra.mxu0 0
    %1179 = vmatpush.bf16.msra.mxu0 0
    %1180 = vmatpush.bf16.msra.mxu0 %v639
    %1181 = vmatpush.bf16.msra.mxu0 %v638
    %1182 = vmatmul.bf16.gmra.mxu0 %v1172
    %v1183 = vpop.f32.mrf.mxu0
    %v1184 = vadd.f32 0.0, %v1183
    %v1185 = vpop.f32.mrf.mxu0
    %1186 = vdwg.mxu0
    %v1187 = vadd.f32 %v1166, %v1184
    %v1188 = vxor.u32 %v1164, 2147483648
    %v1189 = vmul.f32 %v1188, 1.442695
    %v1190 = vpow.pop %v1189
    %v1191 = vadd.f32 %v1190, 1.0
    %v1192 = vrcp.pop %v1191
    %v1193 = vmul.f32 %v1191, %v1192
    %v1194 = vsub.f32 1.0, %v1193
    %v1195 = vmul.f32 %v1192, %v1194
    %v1196 = vadd.f32 %v1192, %v1195
    %vm1197 = vweird.f32 %v1191
    %vm1198 = vweird.f32 %v1192
    %vm1199 = vmor %vm1197, %vm1198
    %v1200 = vsel %vm1199, %v1192, %v1196
    %v1201 = vand.u32 2147483647, %v1191
    %vm1202 = vcmp.eq.f32.partialorder %v1201, 8.507059e+37
    %v1203 = vand.u32 %v1191, 2147483648
    %v1204 = vor.u32 1.1754944e-38, %v1203
    %v1205 = vsel %vm1202, %v1204, %v1200
    %v1206 = vmul.f32 1.0, %v1205
    %v1207 = vtanh.pop %v1164
    %v1208 = vmul.f32 %v1206, %v1086
    %1210 = vrot.lane.b32.xlu0 %v1207, 32
    %v1211 = vpop.permute.xlu0 %1210
    %v1213 = vmul.f32 %v1206, %v1211
    %1215 = vrot.lane.b32.xlu0 %v1213, 32
    %v1216 = vpop.permute.xlu0 %1215
    %v1218 = vadd.f32 %v1208, %v1216
    %v1219 = vtanh.pop %v1218
    %1221 = vrot.lane.b32.xlu0 %v1219, 32
    %v1222 = vpop.permute.xlu0 %1221
    %v1224 = vmul.f32 %v1206, %v1222
    %v1225 = vxor.u32 %v1187, 2147483648
    %v1226 = vmul.f32 %v1225, 1.442695
    %v1227 = vpow.pop %v1226
    %v1228 = vadd.f32 %v1227, 1.0
    %v1229 = vrcp.pop %v1228
    %v1230 = vmul.f32 %v1228, %v1229
    %v1231 = vsub.f32 1.0, %v1230
    %v1232 = vmul.f32 %v1229, %v1231
    %v1233 = vadd.f32 %v1229, %v1232
    %vm1234 = vweird.f32 %v1228
    %vm1235 = vweird.f32 %v1229
    %vm1236 = vmor %vm1234, %vm1235
    %v1237 = vsel %vm1236, %v1229, %v1233
    %v1238 = vand.u32 2147483647, %v1228
    %vm1239 = vcmp.eq.f32.partialorder %v1238, 8.507059e+37
    %v1240 = vand.u32 %v1228, 2147483648
    %v1241 = vor.u32 1.1754944e-38, %v1240
    %v1242 = vsel %vm1239, %v1241, %v1237
    %v1243 = vmul.f32 1.0, %v1242
    %v1244 = vtanh.pop %v1187
    %v1245 = vmul.f32 %v1243, %v1123
    %1247 = vrot.lane.b32.xlu0 %v1244, 32
    %v1248 = vpop.permute.xlu0 %1247
    %v1250 = vmul.f32 %v1243, %v1248
    %1252 = vrot.lane.b32.xlu0 %v1250, 32
    %v1253 = vpop.permute.xlu0 %1252
    %v1255 = vadd.f32 %v1245, %v1253
    %v1256 = vtanh.pop %v1255
    %1258 = vrot.lane.b32.xlu0 %v1256, 32
    %v1259 = vpop.permute.xlu0 %1258
    %v1261 = vmul.f32 %v1243, %v1259
    %1263 = vrot.lane.b32.xlu0 %v1224, 64
    %v1264 = vpop.permute.xlu0 %1263
    %s1266 = scalar_lea.vmem [#allocation4], 8
    %1267 = vst.msk [vmem:[%s1266] sm:$0x3] %vm738, %v1264
    %1269 = vrot.lane.b32.xlu0 %v1261, 64
    %v1270 = vpop.permute.xlu0 %1269
    %s1272 = scalar_lea.vmem [#allocation5], 6
    %1273 = vst.msk [vmem:[%s1272] sm:$0x3] %vm738, %v1270
    %s1274 = scalar_lea.vmem [#allocation2], 10
    %v1275 = vld [vmem:[%s1274] sm:$0x3]
    %v1276 = vpack.c.bf16 %v1224, %v1224
    %1278 = vrot.lane.b32.xlu0 %v1276, 64
    %v1279 = vpop.permute.xlu0 %1278
    %v1281 = vsel %vm228, %v1279, 0
    %1283 = vmatpush.bf16.msra.mxu0 0
    %1284 = vmatpush.bf16.msra.mxu0 0
    %1285 = vmatpush.bf16.msra.mxu0 0
    %1286 = vmatpush.bf16.msra.mxu0 0
    %1287 = vmatpush.bf16.msra.mxu0 0
    %1288 = vmatpush.bf16.msra.mxu0 0
    %1289 = vmatpush.bf16.msra.mxu0 %v608
    %1290 = vmatpush.bf16.msra.mxu0 %v607
    %1291 = vmatmul.bf16.gmra.mxu0 %v1281
    %v1292 = vpop.f32.mrf.mxu0
    %v1293 = vadd.f32 0.0, %v1292
    %v1294 = vpop.f32.mrf.mxu0
    %1295 = vdwg.mxu0
    %v1296 = vadd.f32 %v1275, %v1293
    %s1297 = scalar_lea.vmem [#allocation3], 4
    %v1298 = vld [vmem:[%s1297] sm:$0x3]
    %v1299 = vpack.c.bf16 %v1261, %v1261
    %1301 = vrot.lane.b32.xlu0 %v1299, 64
    %v1302 = vpop.permute.xlu0 %1301
    %v1304 = vsel %vm228, %v1302, 0
    %1306 = vmatpush.bf16.msra.mxu0 0
    %1307 = vmatpush.bf16.msra.mxu0 0
    %1308 = vmatpush.bf16.msra.mxu0 0
    %1309 = vmatpush.bf16.msra.mxu0 0
    %1310 = vmatpush.bf16.msra.mxu0 0
    %1311 = vmatpush.bf16.msra.mxu0 0
    %1312 = vmatpush.bf16.msra.mxu0 %v639
    %1313 = vmatpush.bf16.msra.mxu0 %v638
    %1314 = vmatmul.bf16.gmra.mxu0 %v1304
    %v1315 = vpop.f32.mrf.mxu0
    %v1316 = vadd.f32 0.0, %v1315
    %v1317 = vpop.f32.mrf.mxu0
    %1318 = vdwg.mxu0
    %v1319 = vadd.f32 %v1298, %v1316
    %v1320 = vxor.u32 %v1296, 2147483648
    %v1321 = vmul.f32 %v1320, 1.442695
    %v1322 = vpow.pop %v1321
    %v1323 = vadd.f32 %v1322, 1.0
    %v1324 = vrcp.pop %v1323
    %v1325 = vmul.f32 %v1323, %v1324
    %v1326 = vsub.f32 1.0, %v1325
    %v1327 = vmul.f32 %v1324, %v1326
    %v1328 = vadd.f32 %v1324, %v1327
    %vm1329 = vweird.f32 %v1323
    %vm1330 = vweird.f32 %v1324
    %vm1331 = vmor %vm1329, %vm1330
    %v1332 = vsel %vm1331, %v1324, %v1328
    %v1333 = vand.u32 2147483647, %v1323
    %vm1334 = vcmp.eq.f32.partialorder %v1333, 8.507059e+37
    %v1335 = vand.u32 %v1323, 2147483648
    %v1336 = vor.u32 1.1754944e-38, %v1335
    %v1337 = vsel %vm1334, %v1336, %v1332
    %v1338 = vmul.f32 1.0, %v1337
    %v1339 = vtanh.pop %v1296
    %v1340 = vmul.f32 %v1338, %v1218
    %1342 = vrot.lane.b32.xlu0 %v1339, 32
    %v1343 = vpop.permute.xlu0 %1342
    %v1345 = vmul.f32 %v1338, %v1343
    %1347 = vrot.lane.b32.xlu0 %v1345, 32
    %v1348 = vpop.permute.xlu0 %1347
    %v1350 = vadd.f32 %v1340, %v1348
    %v1351 = vtanh.pop %v1350
    %1353 = vrot.lane.b32.xlu0 %v1351, 32
    %v1354 = vpop.permute.xlu0 %1353
    %v1356 = vmul.f32 %v1338, %v1354
    %v1357 = vxor.u32 %v1319, 2147483648
    %v1358 = vmul.f32 %v1357, 1.442695
    %v1359 = vpow.pop %v1358
    %v1360 = vadd.f32 %v1359, 1.0
    %v1361 = vrcp.pop %v1360
    %v1362 = vmul.f32 %v1360, %v1361
    %v1363 = vsub.f32 1.0, %v1362
    %v1364 = vmul.f32 %v1361, %v1363
    %v1365 = vadd.f32 %v1361, %v1364
    %vm1366 = vweird.f32 %v1360
    %vm1367 = vweird.f32 %v1361
    %vm1368 = vmor %vm1366, %vm1367
    %v1369 = vsel %vm1368, %v1361, %v1365
    %v1370 = vand.u32 2147483647, %v1360
    %vm1371 = vcmp.eq.f32.partialorder %v1370, 8.507059e+37
    %v1372 = vand.u32 %v1360, 2147483648
    %v1373 = vor.u32 1.1754944e-38, %v1372
    %v1374 = vsel %vm1371, %v1373, %v1369
    %v1375 = vmul.f32 1.0, %v1374
    %v1376 = vtanh.pop %v1319
    %v1377 = vmul.f32 %v1375, %v1255
    %1379 = vrot.lane.b32.xlu0 %v1376, 32
    %v1380 = vpop.permute.xlu0 %1379
    %v1382 = vmul.f32 %v1375, %v1380
    %1384 = vrot.lane.b32.xlu0 %v1382, 32
    %v1385 = vpop.permute.xlu0 %1384
    %v1387 = vadd.f32 %v1377, %v1385
    %v1388 = vtanh.pop %v1387
    %1390 = vrot.lane.b32.xlu0 %v1388, 32
    %v1391 = vpop.permute.xlu0 %1390
    %v1393 = vmul.f32 %v1375, %v1391
    %1395 = vrot.lane.b32.xlu0 %v1356, 64
    %v1396 = vpop.permute.xlu0 %1395
    %s1398 = scalar_lea.vmem [#allocation4], 10
    %1399 = vst.msk [vmem:[%s1398] sm:$0x3] %vm738, %v1396
    %1401 = vrot.lane.b32.xlu0 %v1393, 64
    %v1402 = vpop.permute.xlu0 %1401
    %s1404 = scalar_lea.vmem [#allocation5], 4
    %1405 = vst.msk [vmem:[%s1404] sm:$0x3] %vm738, %v1402
    %s1406 = scalar_lea.vmem [#allocation2], 12
    %v1407 = vld [vmem:[%s1406] sm:$0x3]
    %v1408 = vpack.c.bf16 %v1356, %v1356
    %1410 = vrot.lane.b32.xlu0 %v1408, 64
    %v1411 = vpop.permute.xlu0 %1410
    %v1413 = vsel %vm228, %v1411, 0
    %1415 = vmatpush.bf16.msra.mxu0 0
    %1416 = vmatpush.bf16.msra.mxu0 0
    %1417 = vmatpush.bf16.msra.mxu0 0
    %1418 = vmatpush.bf16.msra.mxu0 0
    %1419 = vmatpush.bf16.msra.mxu0 0
    %1420 = vmatpush.bf16.msra.mxu0 0
    %1421 = vmatpush.bf16.msra.mxu0 %v608
    %1422 = vmatpush.bf16.msra.mxu0 %v607
    %1423 = vmatmul.bf16.gmra.mxu0 %v1413
    %v1424 = vpop.f32.mrf.mxu0
    %v1425 = vadd.f32 0.0, %v1424
    %v1426 = vpop.f32.mrf.mxu0
    %1427 = vdwg.mxu0
    %v1428 = vadd.f32 %v1407, %v1425
    %s1429 = scalar_lea.vmem [#allocation3], 2
    %v1430 = vld [vmem:[%s1429] sm:$0x3]
    %v1431 = vpack.c.bf16 %v1393, %v1393
    %1433 = vrot.lane.b32.xlu0 %v1431, 64
    %v1434 = vpop.permute.xlu0 %1433
    %v1436 = vsel %vm228, %v1434, 0
    %1438 = vmatpush.bf16.msra.mxu0 0
    %1439 = vmatpush.bf16.msra.mxu0 0
    %1440 = vmatpush.bf16.msra.mxu0 0
    %1441 = vmatpush.bf16.msra.mxu0 0
    %1442 = vmatpush.bf16.msra.mxu0 0
    %1443 = vmatpush.bf16.msra.mxu0 0
    %1444 = vmatpush.bf16.msra.mxu0 %v639
    %1445 = vmatpush.bf16.msra.mxu0 %v638
    %1446 = vmatmul.bf16.gmra.mxu0 %v1436
    %v1447 = vpop.f32.mrf.mxu0
    %v1448 = vadd.f32 0.0, %v1447
    %v1449 = vpop.f32.mrf.mxu0
    %1450 = vdwg.mxu0
    %v1451 = vadd.f32 %v1430, %v1448
    %v1452 = vxor.u32 %v1428, 2147483648
    %v1453 = vmul.f32 %v1452, 1.442695
    %v1454 = vpow.pop %v1453
    %v1455 = vadd.f32 %v1454, 1.0
    %v1456 = vrcp.pop %v1455
    %v1457 = vmul.f32 %v1455, %v1456
    %v1458 = vsub.f32 1.0, %v1457
    %v1459 = vmul.f32 %v1456, %v1458
    %v1460 = vadd.f32 %v1456, %v1459
    %vm1461 = vweird.f32 %v1455
    %vm1462 = vweird.f32 %v1456
    %vm1463 = vmor %vm1461, %vm1462
    %v1464 = vsel %vm1463, %v1456, %v1460
    %v1465 = vand.u32 2147483647, %v1455
    %vm1466 = vcmp.eq.f32.partialorder %v1465, 8.507059e+37
    %v1467 = vand.u32 %v1455, 2147483648
    %v1468 = vor.u32 1.1754944e-38, %v1467
    %v1469 = vsel %vm1466, %v1468, %v1464
    %v1470 = vmul.f32 1.0, %v1469
    %v1471 = vtanh.pop %v1428
    %v1472 = vmul.f32 %v1470, %v1350
    %1474 = vrot.lane.b32.xlu0 %v1471, 32
    %v1475 = vpop.permute.xlu0 %1474
    %v1477 = vmul.f32 %v1470, %v1475
    %1479 = vrot.lane.b32.xlu0 %v1477, 32
    %v1480 = vpop.permute.xlu0 %1479
    %v1482 = vadd.f32 %v1472, %v1480
    %v1483 = vtanh.pop %v1482
    %1485 = vrot.lane.b32.xlu0 %v1483, 32
    %v1486 = vpop.permute.xlu0 %1485
    %v1488 = vmul.f32 %v1470, %v1486
    %v1489 = vxor.u32 %v1451, 2147483648
    %v1490 = vmul.f32 %v1489, 1.442695
    %v1491 = vpow.pop %v1490
    %v1492 = vadd.f32 %v1491, 1.0
    %v1493 = vrcp.pop %v1492
    %v1494 = vmul.f32 %v1492, %v1493
    %v1495 = vsub.f32 1.0, %v1494
    %v1496 = vmul.f32 %v1493, %v1495
    %v1497 = vadd.f32 %v1493, %v1496
    %vm1498 = vweird.f32 %v1492
    %vm1499 = vweird.f32 %v1493
    %vm1500 = vmor %vm1498, %vm1499
    %v1501 = vsel %vm1500, %v1493, %v1497
    %v1502 = vand.u32 2147483647, %v1492
    %vm1503 = vcmp.eq.f32.partialorder %v1502, 8.507059e+37
    %v1504 = vand.u32 %v1492, 2147483648
    %v1505 = vor.u32 1.1754944e-38, %v1504
    %v1506 = vsel %vm1503, %v1505, %v1501
    %v1507 = vmul.f32 1.0, %v1506
    %v1508 = vtanh.pop %v1451
    %v1509 = vmul.f32 %v1507, %v1387
    %1511 = vrot.lane.b32.xlu0 %v1508, 32
    %v1512 = vpop.permute.xlu0 %1511
    %v1514 = vmul.f32 %v1507, %v1512
    %1516 = vrot.lane.b32.xlu0 %v1514, 32
    %v1517 = vpop.permute.xlu0 %1516
    %v1519 = vadd.f32 %v1509, %v1517
    %v1520 = vtanh.pop %v1519
    %1522 = vrot.lane.b32.xlu0 %v1520, 32
    %v1523 = vpop.permute.xlu0 %1522
    %v1525 = vmul.f32 %v1507, %v1523
    %1527 = vrot.lane.b32.xlu0 %v1488, 64
    %v1528 = vpop.permute.xlu0 %1527
    %s1530 = scalar_lea.vmem [#allocation4], 12
    %1531 = vst.msk [vmem:[%s1530] sm:$0x3] %vm738, %v1528
    %1533 = vrot.lane.b32.xlu0 %v1525, 64
    %v1534 = vpop.permute.xlu0 %1533
    %s1536 = scalar_lea.vmem [#allocation5], 2
    %1537 = vst.msk [vmem:[%s1536] sm:$0x3] %vm738, %v1534
    %s1538 = scalar_lea.vmem [#allocation2], 14
    %v1539 = vld [vmem:[%s1538] sm:$0x3]
    %v1540 = vpack.c.bf16 %v1488, %v1488
    %1542 = vrot.lane.b32.xlu0 %v1540, 64
    %v1543 = vpop.permute.xlu0 %1542
    %v1545 = vsel %vm228, %v1543, 0
    %1547 = vmatpush.bf16.msra.mxu0 0
    %1548 = vmatpush.bf16.msra.mxu0 0
    %1549 = vmatpush.bf16.msra.mxu0 0
    %1550 = vmatpush.bf16.msra.mxu0 0
    %1551 = vmatpush.bf16.msra.mxu0 0
    %1552 = vmatpush.bf16.msra.mxu0 0
    %1553 = vmatpush.bf16.msra.mxu0 %v608
    %1554 = vmatpush.bf16.msra.mxu0 %v607
    %1555 = vmatmul.bf16.gmra.mxu0 %v1545
    %v1556 = vpop.f32.mrf.mxu0
    %v1557 = vadd.f32 0.0, %v1556
    %v1558 = vpop.f32.mrf.mxu0
    %1559 = vdwg.mxu0
    %v1560 = vadd.f32 %v1539, %v1557
    %v1561 = vld [vmem:[#allocation3] sm:$0x3]
    %v1562 = vpack.c.bf16 %v1525, %v1525
    %1564 = vrot.lane.b32.xlu0 %v1562, 64
    %v1565 = vpop.permute.xlu0 %1564
    %v1567 = vsel %vm228, %v1565, 0
    %1569 = vmatpush.bf16.msra.mxu0 0
    %1570 = vmatpush.bf16.msra.mxu0 0
    %1571 = vmatpush.bf16.msra.mxu0 0
    %1572 = vmatpush.bf16.msra.mxu0 0
    %1573 = vmatpush.bf16.msra.mxu0 0
    %1574 = vmatpush.bf16.msra.mxu0 0
    %1575 = vmatpush.bf16.msra.mxu0 %v639
    %1576 = vmatpush.bf16.msra.mxu0 %v638
    %1577 = vmatmul.bf16.gmra.mxu0 %v1567
    %v1578 = vpop.f32.mrf.mxu0
    %v1579 = vadd.f32 0.0, %v1578
    %v1580 = vpop.f32.mrf.mxu0
    %1581 = vdwg.mxu0
    %v1582 = vadd.f32 %v1561, %v1579
    %v1583 = vxor.u32 %v1560, 2147483648
    %v1584 = vmul.f32 %v1583, 1.442695
    %v1585 = vpow.pop %v1584
    %v1586 = vadd.f32 %v1585, 1.0
    %v1587 = vrcp.pop %v1586
    %v1588 = vmul.f32 %v1586, %v1587
    %v1589 = vsub.f32 1.0, %v1588
    %v1590 = vmul.f32 %v1587, %v1589
    %v1591 = vadd.f32 %v1587, %v1590
    %vm1592 = vweird.f32 %v1586
    %vm1593 = vweird.f32 %v1587
    %vm1594 = vmor %vm1592, %vm1593
    %v1595 = vsel %vm1594, %v1587, %v1591
    %v1596 = vand.u32 2147483647, %v1586
    %vm1597 = vcmp.eq.f32.partialorder %v1596, 8.507059e+37
    %v1598 = vand.u32 %v1586, 2147483648
    %v1599 = vor.u32 1.1754944e-38, %v1598
    %v1600 = vsel %vm1597, %v1599, %v1595
    %v1601 = vmul.f32 1.0, %v1600
    %v1602 = vtanh.pop %v1560
    %v1603 = vmul.f32 %v1601, %v1482
    %1605 = vrot.lane.b32.xlu0 %v1602, 32
    %v1606 = vpop.permute.xlu0 %1605
    %v1608 = vmul.f32 %v1601, %v1606
    %1610 = vrot.lane.b32.xlu0 %v1608, 32
    %v1611 = vpop.permute.xlu0 %1610
    %v1613 = vadd.f32 %v1603, %v1611
    %v1614 = vtanh.pop %v1613
    %1616 = vrot.lane.b32.xlu0 %v1614, 32
    %v1617 = vpop.permute.xlu0 %1616
    %v1619 = vmul.f32 %v1601, %v1617
    %v1620 = vxor.u32 %v1582, 2147483648
    %v1621 = vmul.f32 %v1620, 1.442695
    %v1622 = vpow.pop %v1621
    %v1623 = vadd.f32 %v1622, 1.0
    %v1624 = vrcp.pop %v1623
    %v1625 = vmul.f32 %v1623, %v1624
    %v1626 = vsub.f32 1.0, %v1625
    %v1627 = vmul.f32 %v1624, %v1626
    %v1628 = vadd.f32 %v1624, %v1627
    %vm1629 = vweird.f32 %v1623
    %vm1630 = vweird.f32 %v1624
    %vm1631 = vmor %vm1629, %vm1630
    %v1632 = vsel %vm1631, %v1624, %v1628
    %v1633 = vand.u32 2147483647, %v1623
    %vm1634 = vcmp.eq.f32.partialorder %v1633, 8.507059e+37
    %v1635 = vand.u32 %v1623, 2147483648
    %v1636 = vor.u32 1.1754944e-38, %v1635
    %v1637 = vsel %vm1634, %v1636, %v1632
    %v1638 = vmul.f32 1.0, %v1637
    %v1639 = vtanh.pop %v1582
    %v1640 = vmul.f32 %v1638, %v1519
    %1642 = vrot.lane.b32.xlu0 %v1639, 32
    %v1643 = vpop.permute.xlu0 %1642
    %v1645 = vmul.f32 %v1638, %v1643
    %1647 = vrot.lane.b32.xlu0 %v1645, 32
    %v1648 = vpop.permute.xlu0 %1647
    %v1650 = vadd.f32 %v1640, %v1648
    %v1651 = vtanh.pop %v1650
    %1653 = vrot.lane.b32.xlu0 %v1651, 32
    %v1654 = vpop.permute.xlu0 %1653
    %v1656 = vmul.f32 %v1638, %v1654
    %1658 = vrot.lane.b32.xlu0 %v1619, 64
    %v1659 = vpop.permute.xlu0 %1658
    %s1661 = scalar_lea.vmem [#allocation4], 14
    %1662 = vst.msk [vmem:[%s1661] sm:$0x3] %vm738, %v1659
    %1664 = vrot.lane.b32.xlu0 %v1656, 64
    %v1665 = vpop.permute.xlu0 %1664
    %1667 = vst.msk [vmem:[#allocation5] sm:$0x3] %vm738, %v1665
    %v1668 = vld [vmem:[#allocation4] sm:$0xff]
    %v1669 = vld [vmem:[#allocation4 + $0x8] sm:$0xff]
    %v1670 = vpack.c.bf16 %v1669, %v1668
    %v1671 = vld [vmem:[%s13] sm:$0xf]
    %v1672 = vld [vmem:[%s13 + $0x4] sm:$0xf]
    %v1673 = vld [vmem:[%s13 + $0x8] sm:$0xf]
    %v1674 = vld [vmem:[%s13 + $0xc] sm:$0xf]
    %v1675 = vld [vmem:[#allocation5] sm:$0xff]
    %v1676 = vld [vmem:[#allocation5 + $0x8] sm:$0xff]
    %v1677 = vpack.c.bf16 %v1676, %v1675
    %v1678 = vld [vmem:[#allocation21] sm:$0xf]
    %v1679 = vld [vmem:[#allocation21 + $0x4] sm:$0xf]
    %v1680 = vld [vmem:[#allocation21 + $0x8] sm:$0xf]
    %v1681 = vld [vmem:[#allocation21 + $0xc] sm:$0xf]
    %v1686 = vunpack.c.l.b16 %v1678
    %v1687 = vunpack.c.l.b16 %v1679
    %v1688 = vunpack.c.l.b16 %v1680
    %v1689 = vunpack.c.l.b16 %v1681
    %v1690 = vpack.c.b16 %v1687, %v1686
    %v1691 = vpack.c.b16 %v1689, %v1688
    %v1695 = vsel %vm228, %v1677, 0
    %1697 = vmatpush.bf16.msra.mxu0 0
    %1698 = vmatpush.bf16.msra.mxu0 0
    %1699 = vmatpush.bf16.msra.mxu0 0
    %1700 = vmatpush.bf16.msra.mxu0 0
    %1701 = vmatpush.bf16.msra.mxu0 0
    %1702 = vmatpush.bf16.msra.mxu0 0
    %1703 = vmatpush.bf16.msra.mxu0 %v1691
    %1704 = vmatpush.bf16.msra.mxu0 %v1690
    %1705 = vmatmul.bf16.gmra.mxu0 %v1695
    %v1706 = vpop.f32.mrf.mxu0
    %v1707 = vadd.f32 0.0, %v1706
    %v1708 = vpop.f32.mrf.mxu0
    %v1709 = vadd.f32 0.0, %v1708
    %1710 = vdwg.mxu0
    %v1715 = vunpack.c.l.b16 %v1671
    %v1716 = vunpack.c.l.b16 %v1672
    %v1717 = vunpack.c.l.b16 %v1673
    %v1718 = vunpack.c.l.b16 %v1674
    %v1719 = vpack.c.b16 %v1716, %v1715
    %v1720 = vpack.c.b16 %v1718, %v1717
    %v1724 = vsel %vm228, %v1670, 0
    %1726 = vmatpush.bf16.msra.mxu0 0
    %1727 = vmatpush.bf16.msra.mxu0 0
    %1728 = vmatpush.bf16.msra.mxu0 0
    %1729 = vmatpush.bf16.msra.mxu0 0
    %1730 = vmatpush.bf16.msra.mxu0 0
    %1731 = vmatpush.bf16.msra.mxu0 0
    %1732 = vmatpush.bf16.msra.mxu0 %v1720
    %1733 = vmatpush.bf16.msra.mxu0 %v1719
    %1734 = vmatmul.bf16.gmra.mxu0 %v1724
    %v1735 = vpop.f32.mrf.mxu0
    %v1736 = vadd.f32 %v1707, %v1735
    %v1737 = vpop.f32.mrf.mxu0
    %v1738 = vadd.f32 %v1709, %v1737
    %1739 = vdwg.mxu0
    %v1740 = vld [vmem:[%s15] sm:$0x1]
    %v1742 = vperm.slane %v1740, 0
    %v1744 = vadd.f32 %v1736, %v1742
    %v1745 = vadd.f32 %v1738, %v1742
    %1746 = vst [vmem:[#allocation23] sm:$0xff] %v1744
    %1747 = vst [vmem:[#allocation23 + $0x8] sm:$0xff] %v1745
    // Predicated region
    $region106: #{tpu_custom_call.1} parent=1 // pred_check
      _
    $region107: #{tpu_custom_call.1} parent=1 // pred_check_branch
      %1749 = sbr.rel (0) target = $region109
    $region108: #{tpu_custom_call.1} parent=1 // pred_region
      %1751 = vsyncadd [#allocation8], 0
      %s1752 = sshll.u32 [#allocation23], 4
      %s1753 = int_to_ptr.vmem [resolvable:$true] %s1752
      %s1754 = sshll.u32 %s16, 4
      %s1755 = int_to_ptr.hbm [resolvable:$true] %s1754
      %1760 = dma.vmem_to_hbm [thread:$0]  %s1753, 256, %s1755, [#allocation8], 128, 128, 8
    $region109: #{tpu_custom_call.1} parent=1 // pred_fallthru
      _
    // Predicated region
    $region110: #{tpu_custom_call.1} parent=1 // pred_check
      _
    $region111: #{tpu_custom_call.1} parent=1 // pred_check_branch
      %1762 = sbr.rel (0) target = $region113
    $region112: #{tpu_custom_call.1} parent=1 // pred_region
      %1764 = dma.done [#allocation8], 256
    $region113: #{tpu_custom_call.1} parent=1 // pred_fallthru
      _
    %1765 = vsyncpa [#allocation7], 1
    %1766 = vsyncpa [#allocation10], 1
    %1767 = vsyncpa [#allocation13], 1
    %1768 = vsyncpa [#allocation16], 1
    %1769 = vsyncpa [#allocation19], 1
    %1770 = vsyncpa [#allocation22], 1
    %1771 = vsyncpa [#allocation8], 1

</llo_original>
